<compile_context>
chip_gen: v7x
topology: tpu7x:2x2x1
jax: 0.10.0
libtpu: 0.0.40
codegen_flags: <defaults>
</compile_context>

<pallas_src>
import math
import numpy as np
import jax
import jax.numpy as jnp
from jax.experimental import pallas as pl
from jax.experimental.pallas import tpu as pltpu


# ----------------------------- configuration --------------------------------
class Cfg:
    num_features_relation = 32   # NFR
    num_graph = 4                # NG
    num_features_gcn = 32        # NFG (== NFG_ONE)
    out_size = (16, 16)          # (OH, OW)
    pos_threshold = 0.2


LN_EPS = 1e-5
MASK_NEG = -1e30


# ------------------------------- kernel --------------------------------------
def _make_gcn_kernel(TB, N, NFG, NFR, NG):
    OFF_PHI = NG * NFR
    OFF_GCN = 2 * NG * NFR
    TOT = 2 * NG * NFR + NG * NFG

    def gcn_kernel(feat_ref, maskb_ref, w_all_ref, b_all_ref,
                   gamma_ref, beta_ref, out_ref, rel_ref):
        feat = feat_ref[...]                                    # [TB, N, NFG]
        feat_flat = feat.reshape(TB * N, NFG)

        # All graphs' theta / phi / (feat @ W_gcn) in one lane-dense matmul.
        proj = jnp.dot(feat_flat, w_all_ref[...],
                       preferred_element_type=jnp.float32) + b_all_ref[...]
        proj = proj.reshape(TB, N, TOT)                         # [TB, N, 384]

        mask_bias = maskb_ref[...]                              # [TB, N, N]
        acc = jnp.zeros((TB, N, NFG), jnp.float32)

        for g in range(NG):          # NG folded into the kernel, static unroll
            th = proj[:, :, g * NFR:(g + 1) * NFR]              # [TB, N, NFR]
            ph = proj[:, :, OFF_PHI + g * NFR:OFF_PHI + (g + 1) * NFR]
            fg = proj[:, :, OFF_GCN + g * NFG:OFF_GCN + (g + 1) * NFG]

            # similarity (1/sqrt(NFR) already folded into W_theta / b_theta);
            # contract last dims directly -- no explicit transpose.
            sim = jax.lax.dot_general(
                th, ph, dimension_numbers=(((2,), (2,)), ((0,), (0,))),
                preferred_element_type=jnp.float32)             # [TB, N, N]

            # additive position mask + softmax over last dim
            masked = sim + mask_bias
            m = jnp.max(masked, axis=-1, keepdims=True)
            e = jnp.exp(masked - m)
            rel = e * pl.reciprocal(jnp.sum(e, axis=-1, keepdims=True),
                                    approx=True)                # [TB, N, N]

            # (rel @ feat) @ Wg == rel @ (feat @ Wg); feat @ Wg is in proj.
            one = jax.lax.dot_general(
                rel, fg, dimension_numbers=(((2,), (1,)), ((0,), (0,))),
                preferred_element_type=jnp.float32)             # [TB, N, NFG]

            # LayerNorm over channel dim + affine + ReLU
            mu = jnp.mean(one, axis=-1, keepdims=True)
            var = jnp.mean((one - mu) * (one - mu), axis=-1, keepdims=True)
            one = (one - mu) * jax.lax.rsqrt(var + LN_EPS)
            one = one * gamma_ref[g] + beta_ref[g]
            acc = acc + jnp.maximum(one, 0.0)

            if g == NG - 1:          # only the last graph's relation is returned
                rel_ref[...] = rel

        out_ref[...] = acc           # single store per grid step

    return gcn_kernel


# ------------------------------- wrapper --------------------------------------
def gcn_module_forward(graph_boxes_features, boxes_in_flat, params, cfg):
    """graph_boxes_features [B, N, NFG], boxes_in_flat [B*N, 4]."""
    B, N, NFG = graph_boxes_features.shape
    NFR = cfg.num_features_relation
    NG = cfg.num_graph
    OH, OW = cfg.out_size

    # --- position mask (tiny glue, plain JAX; matches calc_pairwise_distance_3d)
    cx = (boxes_in_flat[:, 0] + boxes_in_flat[:, 2]) / 2.0
    cy = (boxes_in_flat[:, 1] + boxes_in_flat[:, 3]) / 2.0
    pos = jnp.stack([cx, cy], axis=-1).reshape(B, N, 2)
    rx = jnp.sum(pos * pos, axis=2, keepdims=True)                   # [B,N,1]
    d2 = rx - 2.0 * jnp.einsum('bnd,bmd->bnm', pos, pos) + jnp.swapaxes(rx, 1, 2)
    dist = jnp.sqrt(jnp.maximum(d2, 0.0))
    mask_bias = jnp.where(dist > cfg.pos_threshold * OW,
                          jnp.float32(MASK_NEG), jnp.float32(0.0))   # additive

    # --- pack per-graph weights lane-dense; fold 1/sqrt(NFR) into theta -------
    scale = 1.0 / math.sqrt(NFR)
    w_th = jnp.transpose(params["w_theta"], (1, 0, 2)).reshape(NFG, NG * NFR)
    w_th = w_th * scale
    w_ph = jnp.transpose(params["w_phi"], (1, 0, 2)).reshape(NFG, NG * NFR)
    w_g = jnp.transpose(params["w_gcn"], (1, 0, 2)).reshape(NFG, NG * NFG)
    w_all = jnp.concatenate([w_th, w_ph, w_g], axis=1)               # [NFG, 384]
    b_all = jnp.concatenate([
        (params["b_theta"] * scale).reshape(-1),
        params["b_phi"].reshape(-1),
        jnp.zeros((NG * NFG,), jnp.float32)], axis=0)[None, :]       # [1, 384]
    TOT = w_all.shape[1]
    gamma = params["ln_gamma"].reshape(NG, 1, NFG)
    beta = params["ln_beta"].reshape(NG, 1, NFG)

    # --- batch blocking: target >=128 rows per step, TB must divide B ---------
    TB = min(B, max(1, 128 // N))
    while B % TB:
        TB -= 1
    grid = (B // TB,)

    kernel = _make_gcn_kernel(TB, N, NFG, NFR, NG)

    grid_spec = pltpu.PrefetchScalarGridSpec(
        num_scalar_prefetch=0,
        grid=grid,
        in_specs=[
            pl.BlockSpec((TB, N, NFG), lambda i: (i, 0, 0)),     # features
            pl.BlockSpec((TB, N, N),   lambda i: (i, 0, 0)),     # additive mask
            pl.BlockSpec((NFG, TOT),   lambda i: (0, 0)),        # packed weights
            pl.BlockSpec((1, TOT),     lambda i: (0, 0)),        # packed biases
            pl.BlockSpec((NG, 1, NFG), lambda i: (0, 0, 0)),     # ln gamma
            pl.BlockSpec((NG, 1, NFG), lambda i: (0, 0, 0)),     # ln beta
        ],
        out_specs=[
            pl.BlockSpec((TB, N, NFG), lambda i: (i, 0, 0)),     # summed features
            pl.BlockSpec((TB, N, N),   lambda i: (i, 0, 0)),     # relation graph
        ],
    )

    out_feat, relation_graph = pl.pallas_call(
        kernel,
        out_shape=(jax.ShapeDtypeStruct((B, N, NFG), jnp.float32),
                   jax.ShapeDtypeStruct((B, N, N), jnp.float32)),
        grid_spec=grid_spec,
        compiler_params=pltpu.CompilerParams(
            dimension_semantics=("parallel",)),
    )(graph_boxes_features, mask_bias, w_all, b_all, gamma, beta)

    return out_feat, relation_graph


# --------------------------- pure-JAX reference -------------------------------
def gcn_module_reference(feat, boxes_in_flat, params, cfg):
    B, N, NFG = feat.shape
    NFR = cfg.num_features_relation
    NG = cfg.num_graph
    OH, OW = cfg.out_size

    cx = (boxes_in_flat[:, 0] + boxes_in_flat[:, 2]) / 2.0
    cy = (boxes_in_flat[:, 1] + boxes_in_flat[:, 3]) / 2.0
    pos = jnp.stack([cx, cy], axis=-1).reshape(B, N, 2)
    rx = jnp.sum(pos * pos, axis=2, keepdims=True)
    d2 = rx - 2.0 * jnp.einsum('bnd,bmd->bnm', pos, pos) + jnp.swapaxes(rx, 1, 2)
    dist = jnp.sqrt(jnp.maximum(d2, 0.0))
    mask = dist > cfg.pos_threshold * OW

    acc = jnp.zeros_like(feat)
    rel = None
    for g in range(NG):
        theta = feat @ params["w_theta"][g] + params["b_theta"][g]
        phi = feat @ params["w_phi"][g] + params["b_phi"][g]
        sim = jnp.einsum('bnf,bmf->bnm', theta, phi) / math.sqrt(NFR)
        sim = jnp.where(mask, -jnp.inf, sim)
        rel = jax.nn.softmax(sim, axis=-1)
        one = jnp.einsum('bnm,bmf->bnf', rel, feat) @ params["w_gcn"][g]
        mu = one.mean(-1, keepdims=True)
        var = ((one - mu) ** 2).mean(-1, keepdims=True)
        one = (one - mu) / jnp.sqrt(var + LN_EPS)
        one = one * params["ln_gamma"][g] + params["ln_beta"][g]
        acc = acc + jnp.maximum(one, 0.0)
    return acc, rel


# --------------------------------- main ---------------------------------------
if __name__ == "__main__":
    cfg = Cfg()
    B, N = 2, 8
    NFG = cfg.num_features_gcn
    NFR = cfg.num_features_relation
    NG = cfg.num_graph
    OH, OW = cfg.out_size

    key = jax.random.PRNGKey(0)
    ks = jax.random.split(key, 10)

    # deterministic synthetic parameters (Linear weights stored as [in, out])
    params = {
        "w_theta": jax.random.normal(ks[0], (NG, NFG, NFR), jnp.float32) * 0.1,
        "b_theta": jax.random.normal(ks[1], (NG, NFR), jnp.float32) * 0.1,
        "w_phi":   jax.random.normal(ks[2], (NG, NFG, NFR), jnp.float32) * 0.1,
        "b_phi":   jax.random.normal(ks[3], (NG, NFR), jnp.float32) * 0.1,
        "w_gcn":   jax.random.normal(ks[4], (NG, NFG, NFG), jnp.float32) * 0.1,
        "ln_gamma": jnp.ones((NG, NFG), jnp.float32)
                    + 0.05 * jax.random.normal(ks[5], (NG, NFG), jnp.float32),
        "ln_beta":  0.05 * jax.random.normal(ks[6], (NG, NFG), jnp.float32),
    }

    graph_boxes_features = jax.random.normal(ks[7], (B, N, NFG), jnp.float32)
    # boxes_in_flat: [B*N, 4] boxes (x1, y1, x2, y2) in output-map coordinates
    xy1 = jax.random.uniform(ks[8], (B * N, 2), jnp.float32, 0.0, OW - 2.0)
    wh = jax.random.uniform(ks[9], (B * N, 2), jnp.float32, 1.0, 3.0)
    boxes_in_flat = jnp.concatenate([xy1, xy1 + wh], axis=-1)

    out_feat, relation_graph = gcn_module_forward(
        graph_boxes_features, boxes_in_flat, params, cfg)
    jax.block_until_ready((out_feat, relation_graph))

    ref_feat, ref_rel = gcn_module_reference(
        graph_boxes_features, boxes_in_flat, params, cfg)

    # tolerance loosened slightly for pl.reciprocal(approx=True) in the softmax
    np.testing.assert_allclose(np.asarray(out_feat), np.asarray(ref_feat),
                               rtol=2e-3, atol=2e-3)
    np.testing.assert_allclose(np.asarray(relation_graph), np.asarray(ref_rel),
                               rtol=2e-3, atol=2e-3)
    print("KERNEL_OK")
</pallas_src>

<mosaic_0001>
module attributes {stable_mosaic.version = 11 : i64} {
  func.func @gcn_kernel(%arg0: i32, %arg1: memref<2x8x32xf32, #tpu.memory_space<vmem>>, %arg2: memref<2x8x8xf32, #tpu.memory_space<vmem>>, %arg3: memref<32x384xf32, #tpu.memory_space<vmem>>, %arg4: memref<1x384xf32, #tpu.memory_space<vmem>>, %arg5: memref<4x1x32xf32, #tpu.memory_space<vmem>>, %arg6: memref<4x1x32xf32, #tpu.memory_space<vmem>>, %arg7: memref<2x8x32xf32, #tpu.memory_space<vmem>>, %arg8: memref<2x8x8xf32, #tpu.memory_space<vmem>>) attributes {dimension_semantics = [#tpu.dimension_semantics<parallel>], iteration_bounds = array<i64: 1>, scalar_prefetch = 0 : i64, scratch_operands = 0 : i64, tpu.core_type = #tpu.core_type<tc>, window_params = [{transform_indices = @transform_0, window_bounds = array<i64: 2, 8, 32>}, {transform_indices = @transform_1, window_bounds = array<i64: 2, 8, 8>}, {pipeline_mode = #tpu.pipeline_mode<synchronous>, transform_indices = @transform_2, window_bounds = array<i64: 32, 384>}, {pipeline_mode = #tpu.pipeline_mode<synchronous>, transform_indices = @transform_3, window_bounds = array<i64: 1, 384>}, {pipeline_mode = #tpu.pipeline_mode<synchronous>, transform_indices = @transform_4, window_bounds = array<i64: 4, 1, 32>}, {pipeline_mode = #tpu.pipeline_mode<synchronous>, transform_indices = @transform_5, window_bounds = array<i64: 4, 1, 32>}, {transform_indices = @transform_6, window_bounds = array<i64: 2, 8, 32>}, {transform_indices = @transform_7, window_bounds = array<i64: 2, 8, 8>}]} {
    %c0 = arith.constant 0 : index
    %c0_0 = arith.constant 0 : index
    %c0_1 = arith.constant 0 : index
    %0 = vector.load %arg1[%c0, %c0_0, %c0_1] : memref<2x8x32xf32, #tpu.memory_space<vmem>>, vector<2x8x32xf32>
    %1 = vector.shape_cast %0 : vector<2x8x32xf32> to vector<16x32xf32>
    %c0_2 = arith.constant 0 : index
    %c0_3 = arith.constant 0 : index
    %2 = vector.load %arg3[%c0_2, %c0_3] : memref<32x384xf32, #tpu.memory_space<vmem>>, vector<32x384xf32>
    %cst = arith.constant dense<0.000000e+00> : vector<16x384xf32>
    %3 = tpu.matmul %1, %2, %cst {dimension_numbers = #tpu.dot_dimension_numbers<[1], [0], [0], [1], [0, 0, 1, 1], [], []>} : vector<16x32xf32>, vector<32x384xf32>, vector<16x384xf32> -> vector<16x384xf32>
    %c0_4 = arith.constant 0 : index
    %c0_5 = arith.constant 0 : index
    %4 = vector.load %arg4[%c0_4, %c0_5] : memref<1x384xf32, #tpu.memory_space<vmem>>, vector<1x384xf32>
    %5 = vector.broadcast %4 : vector<1x384xf32> to vector<16x384xf32>
    %6 = arith.addf %3, %5 : vector<16x384xf32>
    %7 = vector.shape_cast %6 : vector<16x384xf32> to vector<2x8x384xf32>
    %c0_6 = arith.constant 0 : index
    %c0_7 = arith.constant 0 : index
    %c0_8 = arith.constant 0 : index
    %8 = vector.load %arg2[%c0_6, %c0_7, %c0_8] : memref<2x8x8xf32, #tpu.memory_space<vmem>>, vector<2x8x8xf32>
    %cst_9 = arith.constant 0.000000e+00 : f32
    %9 = vector.broadcast %cst_9 : f32 to vector<2x8x32xf32>
    %10 = vector.extract_strided_slice %7 {offsets = [0, 0, 0], sizes = [2, 8, 32], strides = [1, 1, 1]} : vector<2x8x384xf32> to vector<2x8x32xf32>
    %11 = vector.extract_strided_slice %7 {offsets = [0, 0, 128], sizes = [2, 8, 32], strides = [1, 1, 1]} : vector<2x8x384xf32> to vector<2x8x32xf32>
    %12 = vector.extract_strided_slice %7 {offsets = [0, 0, 256], sizes = [2, 8, 32], strides = [1, 1, 1]} : vector<2x8x384xf32> to vector<2x8x32xf32>
    %cst_10 = arith.constant dense<0.000000e+00> : vector<2x8x8xf32>
    %13 = tpu.matmul %10, %11, %cst_10 {dimension_numbers = #tpu.dot_dimension_numbers<[2], [2], [1], [1], [0, 0, 0, 1, 1, 1], [0], [0]>} : vector<2x8x32xf32>, vector<2x8x32xf32>, vector<2x8x8xf32> -> vector<2x8x8xf32>
    %14 = arith.addf %13, %8 : vector<2x8x8xf32>
    %cst_11 = arith.constant dense<0xFF800000> : vector<2x8xf32>
    %15 = vector.multi_reduction <maximumf>, %14, %cst_11 [2] : vector<2x8x8xf32> to vector<2x8xf32>
    %16 = vector.shape_cast %15 : vector<2x8xf32> to vector<2x8x1xf32>
    %17 = vector.broadcast %16 : vector<2x8x1xf32> to vector<2x8x8xf32>
    %18 = arith.subf %14, %17 : vector<2x8x8xf32>
    %19 = math.exp %18 : vector<2x8x8xf32>
    %cst_12 = arith.constant dense<0.000000e+00> : vector<2x8xf32>
    %20 = vector.multi_reduction <add>, %19, %cst_12 [2] : vector<2x8x8xf32> to vector<2x8xf32>
    %21 = vector.shape_cast %20 : vector<2x8xf32> to vector<2x8x1xf32>
    %22 = tpu.reciprocal %21 {approx = true} : vector<2x8x1xf32> -> vector<2x8x1xf32>
    %23 = vector.broadcast %22 : vector<2x8x1xf32> to vector<2x8x8xf32>
    %24 = arith.mulf %19, %23 : vector<2x8x8xf32>
    %cst_13 = arith.constant dense<0.000000e+00> : vector<2x8x32xf32>
    %25 = tpu.matmul %24, %12, %cst_13 {dimension_numbers = #tpu.dot_dimension_numbers<[2], [1], [1], [2], [0, 0, 0, 1, 1, 2], [0], [0]>} : vector<2x8x8xf32>, vector<2x8x32xf32>, vector<2x8x32xf32> -> vector<2x8x32xf32>
    %cst_14 = arith.constant dense<0.000000e+00> : vector<2x8xf32>
    %26 = vector.multi_reduction <add>, %25, %cst_14 [2] : vector<2x8x32xf32> to vector<2x8xf32>
    %27 = vector.shape_cast %26 : vector<2x8xf32> to vector<2x8x1xf32>
    %cst_15 = arith.constant 3.200000e+01 : f32
    %28 = vector.broadcast %cst_15 : f32 to vector<2x8x1xf32>
    %29 = arith.divf %27, %28 : vector<2x8x1xf32>
    %30 = vector.broadcast %29 : vector<2x8x1xf32> to vector<2x8x32xf32>
    %31 = arith.subf %25, %30 : vector<2x8x32xf32>
    %32 = vector.broadcast %29 : vector<2x8x1xf32> to vector<2x8x32xf32>
    %33 = arith.subf %25, %32 : vector<2x8x32xf32>
    %34 = arith.mulf %31, %33 : vector<2x8x32xf32>
    %cst_16 = arith.constant dense<0.000000e+00> : vector<2x8xf32>
    %35 = vector.multi_reduction <add>, %34, %cst_16 [2] : vector<2x8x32xf32> to vector<2x8xf32>
    %36 = vector.shape_cast %35 : vector<2x8xf32> to vector<2x8x1xf32>
    %cst_17 = arith.constant 3.200000e+01 : f32
    %37 = vector.broadcast %cst_17 : f32 to vector<2x8x1xf32>
    %38 = arith.divf %36, %37 : vector<2x8x1xf32>
    %39 = vector.broadcast %29 : vector<2x8x1xf32> to vector<2x8x32xf32>
    %40 = arith.subf %25, %39 : vector<2x8x32xf32>
    %cst_18 = arith.constant 9.99999974E-6 : f32
    %41 = vector.broadcast %cst_18 : f32 to vector<2x8x1xf32>
    %42 = arith.addf %38, %41 : vector<2x8x1xf32>
    %43 = math.rsqrt %42 : vector<2x8x1xf32>
    %44 = vector.broadcast %43 : vector<2x8x1xf32> to vector<2x8x32xf32>
    %45 = arith.mulf %40, %44 : vector<2x8x32xf32>
    %c0_19 = arith.constant 0 : index
    %c0_20 = arith.constant 0 : index
    %c0_21 = arith.constant 0 : index
    %46 = vector.load %arg5[%c0_19, %c0_20, %c0_21] : memref<4x1x32xf32, #tpu.memory_space<vmem>>, vector<1x1x32xf32>
    %47 = vector.shape_cast %46 : vector<1x1x32xf32> to vector<1x32xf32>
    %48 = vector.shape_cast %47 : vector<1x32xf32> to vector<1x1x32xf32>
    %49 = vector.broadcast %48 : vector<1x1x32xf32> to vector<2x8x32xf32>
    %50 = arith.mulf %45, %49 : vector<2x8x32xf32>
    %c0_22 = arith.constant 0 : index
    %c0_23 = arith.constant 0 : index
    %c0_24 = arith.constant 0 : index
    %51 = vector.load %arg6[%c0_22, %c0_23, %c0_24] : memref<4x1x32xf32, #tpu.memory_space<vmem>>, vector<1x1x32xf32>
    %52 = vector.shape_cast %51 : vector<1x1x32xf32> to vector<1x32xf32>
    %53 = vector.shape_cast %52 : vector<1x32xf32> to vector<1x1x32xf32>
    %54 = vector.broadcast %53 : vector<1x1x32xf32> to vector<2x8x32xf32>
    %55 = arith.addf %50, %54 : vector<2x8x32xf32>
    %cst_25 = arith.constant 0.000000e+00 : f32
    %56 = vector.broadcast %cst_25 : f32 to vector<2x8x32xf32>
    %57 = arith.maximumf %55, %56 : vector<2x8x32xf32>
    %58 = arith.addf %9, %57 : vector<2x8x32xf32>
    %59 = vector.extract_strided_slice %7 {offsets = [0, 0, 32], sizes = [2, 8, 32], strides = [1, 1, 1]} : vector<2x8x384xf32> to vector<2x8x32xf32>
    %60 = vector.extract_strided_slice %7 {offsets = [0, 0, 160], sizes = [2, 8, 32], strides = [1, 1, 1]} : vector<2x8x384xf32> to vector<2x8x32xf32>
    %61 = vector.extract_strided_slice %7 {offsets = [0, 0, 288], sizes = [2, 8, 32], strides = [1, 1, 1]} : vector<2x8x384xf32> to vector<2x8x32xf32>
    %cst_26 = arith.constant dense<0.000000e+00> : vector<2x8x8xf32>
    %62 = tpu.matmul %59, %60, %cst_26 {dimension_numbers = #tpu.dot_dimension_numbers<[2], [2], [1], [1], [0, 0, 0, 1, 1, 1], [0], [0]>} : vector<2x8x32xf32>, vector<2x8x32xf32>, vector<2x8x8xf32> -> vector<2x8x8xf32>
    %63 = arith.addf %62, %8 : vector<2x8x8xf32>
    %cst_27 = arith.constant dense<0xFF800000> : vector<2x8xf32>
    %64 = vector.multi_reduction <maximumf>, %63, %cst_27 [2] : vector<2x8x8xf32> to vector<2x8xf32>
    %65 = vector.shape_cast %64 : vector<2x8xf32> to vector<2x8x1xf32>
    %66 = vector.broadcast %65 : vector<2x8x1xf32> to vector<2x8x8xf32>
    %67 = arith.subf %63, %66 : vector<2x8x8xf32>
    %68 = math.exp %67 : vector<2x8x8xf32>
    %cst_28 = arith.constant dense<0.000000e+00> : vector<2x8xf32>
    %69 = vector.multi_reduction <add>, %68, %cst_28 [2] : vector<2x8x8xf32> to vector<2x8xf32>
    %70 = vector.shape_cast %69 : vector<2x8xf32> to vector<2x8x1xf32>
    %71 = tpu.reciprocal %70 {approx = true} : vector<2x8x1xf32> -> vector<2x8x1xf32>
    %72 = vector.broadcast %71 : vector<2x8x1xf32> to vector<2x8x8xf32>
    %73 = arith.mulf %68, %72 : vector<2x8x8xf32>
    %cst_29 = arith.constant dense<0.000000e+00> : vector<2x8x32xf32>
    %74 = tpu.matmul %73, %61, %cst_29 {dimension_numbers = #tpu.dot_dimension_numbers<[2], [1], [1], [2], [0, 0, 0, 1, 1, 2], [0], [0]>} : vector<2x8x8xf32>, vector<2x8x32xf32>, vector<2x8x32xf32> -> vector<2x8x32xf32>
    %cst_30 = arith.constant dense<0.000000e+00> : vector<2x8xf32>
    %75 = vector.multi_reduction <add>, %74, %cst_30 [2] : vector<2x8x32xf32> to vector<2x8xf32>
    %76 = vector.shape_cast %75 : vector<2x8xf32> to vector<2x8x1xf32>
    %cst_31 = arith.constant 3.200000e+01 : f32
    %77 = vector.broadcast %cst_31 : f32 to vector<2x8x1xf32>
    %78 = arith.divf %76, %77 : vector<2x8x1xf32>
    %79 = vector.broadcast %78 : vector<2x8x1xf32> to vector<2x8x32xf32>
    %80 = arith.subf %74, %79 : vector<2x8x32xf32>
    %81 = vector.broadcast %78 : vector<2x8x1xf32> to vector<2x8x32xf32>
    %82 = arith.subf %74, %81 : vector<2x8x32xf32>
    %83 = arith.mulf %80, %82 : vector<2x8x32xf32>
    %cst_32 = arith.constant dense<0.000000e+00> : vector<2x8xf32>
    %84 = vector.multi_reduction <add>, %83, %cst_32 [2] : vector<2x8x32xf32> to vector<2x8xf32>
    %85 = vector.shape_cast %84 : vector<2x8xf32> to vector<2x8x1xf32>
    %cst_33 = arith.constant 3.200000e+01 : f32
    %86 = vector.broadcast %cst_33 : f32 to vector<2x8x1xf32>
    %87 = arith.divf %85, %86 : vector<2x8x1xf32>
    %88 = vector.broadcast %78 : vector<2x8x1xf32> to vector<2x8x32xf32>
    %89 = arith.subf %74, %88 : vector<2x8x32xf32>
    %cst_34 = arith.constant 9.99999974E-6 : f32
    %90 = vector.broadcast %cst_34 : f32 to vector<2x8x1xf32>
    %91 = arith.addf %87, %90 : vector<2x8x1xf32>
    %92 = math.rsqrt %91 : vector<2x8x1xf32>
    %93 = vector.broadcast %92 : vector<2x8x1xf32> to vector<2x8x32xf32>
    %94 = arith.mulf %89, %93 : vector<2x8x32xf32>
    %c1 = arith.constant 1 : index
    %c0_35 = arith.constant 0 : index
    %c0_36 = arith.constant 0 : index
    %95 = vector.load %arg5[%c1, %c0_35, %c0_36] : memref<4x1x32xf32, #tpu.memory_space<vmem>>, vector<1x1x32xf32>
    %96 = vector.shape_cast %95 : vector<1x1x32xf32> to vector<1x32xf32>
    %97 = vector.shape_cast %96 : vector<1x32xf32> to vector<1x1x32xf32>
    %98 = vector.broadcast %97 : vector<1x1x32xf32> to vector<2x8x32xf32>
    %99 = arith.mulf %94, %98 : vector<2x8x32xf32>
    %c1_37 = arith.constant 1 : index
    %c0_38 = arith.constant 0 : index
    %c0_39 = arith.constant 0 : index
    %100 = vector.load %arg6[%c1_37, %c0_38, %c0_39] : memref<4x1x32xf32, #tpu.memory_space<vmem>>, vector<1x1x32xf32>
    %101 = vector.shape_cast %100 : vector<1x1x32xf32> to vector<1x32xf32>
    %102 = vector.shape_cast %101 : vector<1x32xf32> to vector<1x1x32xf32>
    %103 = vector.broadcast %102 : vector<1x1x32xf32> to vector<2x8x32xf32>
    %104 = arith.addf %99, %103 : vector<2x8x32xf32>
    %cst_40 = arith.constant 0.000000e+00 : f32
    %105 = vector.broadcast %cst_40 : f32 to vector<2x8x32xf32>
    %106 = arith.maximumf %104, %105 : vector<2x8x32xf32>
    %107 = arith.addf %58, %106 : vector<2x8x32xf32>
    %108 = vector.extract_strided_slice %7 {offsets = [0, 0, 64], sizes = [2, 8, 32], strides = [1, 1, 1]} : vector<2x8x384xf32> to vector<2x8x32xf32>
    %109 = vector.extract_strided_slice %7 {offsets = [0, 0, 192], sizes = [2, 8, 32], strides = [1, 1, 1]} : vector<2x8x384xf32> to vector<2x8x32xf32>
    %110 = vector.extract_strided_slice %7 {offsets = [0, 0, 320], sizes = [2, 8, 32], strides = [1, 1, 1]} : vector<2x8x384xf32> to vector<2x8x32xf32>
    %cst_41 = arith.constant dense<0.000000e+00> : vector<2x8x8xf32>
    %111 = tpu.matmul %108, %109, %cst_41 {dimension_numbers = #tpu.dot_dimension_numbers<[2], [2], [1], [1], [0, 0, 0, 1, 1, 1], [0], [0]>} : vector<2x8x32xf32>, vector<2x8x32xf32>, vector<2x8x8xf32> -> vector<2x8x8xf32>
    %112 = arith.addf %111, %8 : vector<2x8x8xf32>
    %cst_42 = arith.constant dense<0xFF800000> : vector<2x8xf32>
    %113 = vector.multi_reduction <maximumf>, %112, %cst_42 [2] : vector<2x8x8xf32> to vector<2x8xf32>
    %114 = vector.shape_cast %113 : vector<2x8xf32> to vector<2x8x1xf32>
    %115 = vector.broadcast %114 : vector<2x8x1xf32> to vector<2x8x8xf32>
    %116 = arith.subf %112, %115 : vector<2x8x8xf32>
    %117 = math.exp %116 : vector<2x8x8xf32>
    %cst_43 = arith.constant dense<0.000000e+00> : vector<2x8xf32>
    %118 = vector.multi_reduction <add>, %117, %cst_43 [2] : vector<2x8x8xf32> to vector<2x8xf32>
    %119 = vector.shape_cast %118 : vector<2x8xf32> to vector<2x8x1xf32>
    %120 = tpu.reciprocal %119 {approx = true} : vector<2x8x1xf32> -> vector<2x8x1xf32>
    %121 = vector.broadcast %120 : vector<2x8x1xf32> to vector<2x8x8xf32>
    %122 = arith.mulf %117, %121 : vector<2x8x8xf32>
    %cst_44 = arith.constant dense<0.000000e+00> : vector<2x8x32xf32>
    %123 = tpu.matmul %122, %110, %cst_44 {dimension_numbers = #tpu.dot_dimension_numbers<[2], [1], [1], [2], [0, 0, 0, 1, 1, 2], [0], [0]>} : vector<2x8x8xf32>, vector<2x8x32xf32>, vector<2x8x32xf32> -> vector<2x8x32xf32>
    %cst_45 = arith.constant dense<0.000000e+00> : vector<2x8xf32>
    %124 = vector.multi_reduction <add>, %123, %cst_45 [2] : vector<2x8x32xf32> to vector<2x8xf32>
    %125 = vector.shape_cast %124 : vector<2x8xf32> to vector<2x8x1xf32>
    %cst_46 = arith.constant 3.200000e+01 : f32
    %126 = vector.broadcast %cst_46 : f32 to vector<2x8x1xf32>
    %127 = arith.divf %125, %126 : vector<2x8x1xf32>
    %128 = vector.broadcast %127 : vector<2x8x1xf32> to vector<2x8x32xf32>
    %129 = arith.subf %123, %128 : vector<2x8x32xf32>
    %130 = vector.broadcast %127 : vector<2x8x1xf32> to vector<2x8x32xf32>
    %131 = arith.subf %123, %130 : vector<2x8x32xf32>
    %132 = arith.mulf %129, %131 : vector<2x8x32xf32>
    %cst_47 = arith.constant dense<0.000000e+00> : vector<2x8xf32>
    %133 = vector.multi_reduction <add>, %132, %cst_47 [2] : vector<2x8x32xf32> to vector<2x8xf32>
    %134 = vector.shape_cast %133 : vector<2x8xf32> to vector<2x8x1xf32>
    %cst_48 = arith.constant 3.200000e+01 : f32
    %135 = vector.broadcast %cst_48 : f32 to vector<2x8x1xf32>
    %136 = arith.divf %134, %135 : vector<2x8x1xf32>
    %137 = vector.broadcast %127 : vector<2x8x1xf32> to vector<2x8x32xf32>
    %138 = arith.subf %123, %137 : vector<2x8x32xf32>
    %cst_49 = arith.constant 9.99999974E-6 : f32
    %139 = vector.broadcast %cst_49 : f32 to vector<2x8x1xf32>
    %140 = arith.addf %136, %139 : vector<2x8x1xf32>
    %141 = math.rsqrt %140 : vector<2x8x1xf32>
    %142 = vector.broadcast %141 : vector<2x8x1xf32> to vector<2x8x32xf32>
    %143 = arith.mulf %138, %142 : vector<2x8x32xf32>
    %c2 = arith.constant 2 : index
    %c0_50 = arith.constant 0 : index
    %c0_51 = arith.constant 0 : index
    %144 = vector.load %arg5[%c2, %c0_50, %c0_51] : memref<4x1x32xf32, #tpu.memory_space<vmem>>, vector<1x1x32xf32>
    %145 = vector.shape_cast %144 : vector<1x1x32xf32> to vector<1x32xf32>
    %146 = vector.shape_cast %145 : vector<1x32xf32> to vector<1x1x32xf32>
    %147 = vector.broadcast %146 : vector<1x1x32xf32> to vector<2x8x32xf32>
    %148 = arith.mulf %143, %147 : vector<2x8x32xf32>
    %c2_52 = arith.constant 2 : index
    %c0_53 = arith.constant 0 : index
    %c0_54 = arith.constant 0 : index
    %149 = vector.load %arg6[%c2_52, %c0_53, %c0_54] : memref<4x1x32xf32, #tpu.memory_space<vmem>>, vector<1x1x32xf32>
    %150 = vector.shape_cast %149 : vector<1x1x32xf32> to vector<1x32xf32>
    %151 = vector.shape_cast %150 : vector<1x32xf32> to vector<1x1x32xf32>
    %152 = vector.broadcast %151 : vector<1x1x32xf32> to vector<2x8x32xf32>
    %153 = arith.addf %148, %152 : vector<2x8x32xf32>
    %cst_55 = arith.constant 0.000000e+00 : f32
    %154 = vector.broadcast %cst_55 : f32 to vector<2x8x32xf32>
    %155 = arith.maximumf %153, %154 : vector<2x8x32xf32>
    %156 = arith.addf %107, %155 : vector<2x8x32xf32>
    %157 = vector.extract_strided_slice %7 {offsets = [0, 0, 96], sizes = [2, 8, 32], strides = [1, 1, 1]} : vector<2x8x384xf32> to vector<2x8x32xf32>
    %158 = vector.extract_strided_slice %7 {offsets = [0, 0, 224], sizes = [2, 8, 32], strides = [1, 1, 1]} : vector<2x8x384xf32> to vector<2x8x32xf32>
    %159 = vector.extract_strided_slice %7 {offsets = [0, 0, 352], sizes = [2, 8, 32], strides = [1, 1, 1]} : vector<2x8x384xf32> to vector<2x8x32xf32>
    %cst_56 = arith.constant dense<0.000000e+00> : vector<2x8x8xf32>
    %160 = tpu.matmul %157, %158, %cst_56 {dimension_numbers = #tpu.dot_dimension_numbers<[2], [2], [1], [1], [0, 0, 0, 1, 1, 1], [0], [0]>} : vector<2x8x32xf32>, vector<2x8x32xf32>, vector<2x8x8xf32> -> vector<2x8x8xf32>
    %161 = arith.addf %160, %8 : vector<2x8x8xf32>
    %cst_57 = arith.constant dense<0xFF800000> : vector<2x8xf32>
    %162 = vector.multi_reduction <maximumf>, %161, %cst_57 [2] : vector<2x8x8xf32> to vector<2x8xf32>
    %163 = vector.shape_cast %162 : vector<2x8xf32> to vector<2x8x1xf32>
    %164 = vector.broadcast %163 : vector<2x8x1xf32> to vector<2x8x8xf32>
    %165 = arith.subf %161, %164 : vector<2x8x8xf32>
    %166 = math.exp %165 : vector<2x8x8xf32>
    %cst_58 = arith.constant dense<0.000000e+00> : vector<2x8xf32>
    %167 = vector.multi_reduction <add>, %166, %cst_58 [2] : vector<2x8x8xf32> to vector<2x8xf32>
    %168 = vector.shape_cast %167 : vector<2x8xf32> to vector<2x8x1xf32>
    %169 = tpu.reciprocal %168 {approx = true} : vector<2x8x1xf32> -> vector<2x8x1xf32>
    %170 = vector.broadcast %169 : vector<2x8x1xf32> to vector<2x8x8xf32>
    %171 = arith.mulf %166, %170 : vector<2x8x8xf32>
    %cst_59 = arith.constant dense<0.000000e+00> : vector<2x8x32xf32>
    %172 = tpu.matmul %171, %159, %cst_59 {dimension_numbers = #tpu.dot_dimension_numbers<[2], [1], [1], [2], [0, 0, 0, 1, 1, 2], [0], [0]>} : vector<2x8x8xf32>, vector<2x8x32xf32>, vector<2x8x32xf32> -> vector<2x8x32xf32>
    %cst_60 = arith.constant dense<0.000000e+00> : vector<2x8xf32>
    %173 = vector.multi_reduction <add>, %172, %cst_60 [2] : vector<2x8x32xf32> to vector<2x8xf32>
    %174 = vector.shape_cast %173 : vector<2x8xf32> to vector<2x8x1xf32>
    %cst_61 = arith.constant 3.200000e+01 : f32
    %175 = vector.broadcast %cst_61 : f32 to vector<2x8x1xf32>
    %176 = arith.divf %174, %175 : vector<2x8x1xf32>
    %177 = vector.broadcast %176 : vector<2x8x1xf32> to vector<2x8x32xf32>
    %178 = arith.subf %172, %177 : vector<2x8x32xf32>
    %179 = vector.broadcast %176 : vector<2x8x1xf32> to vector<2x8x32xf32>
    %180 = arith.subf %172, %179 : vector<2x8x32xf32>
    %181 = arith.mulf %178, %180 : vector<2x8x32xf32>
    %cst_62 = arith.constant dense<0.000000e+00> : vector<2x8xf32>
    %182 = vector.multi_reduction <add>, %181, %cst_62 [2] : vector<2x8x32xf32> to vector<2x8xf32>
    %183 = vector.shape_cast %182 : vector<2x8xf32> to vector<2x8x1xf32>
    %cst_63 = arith.constant 3.200000e+01 : f32
    %184 = vector.broadcast %cst_63 : f32 to vector<2x8x1xf32>
    %185 = arith.divf %183, %184 : vector<2x8x1xf32>
    %186 = vector.broadcast %176 : vector<2x8x1xf32> to vector<2x8x32xf32>
    %187 = arith.subf %172, %186 : vector<2x8x32xf32>
    %cst_64 = arith.constant 9.99999974E-6 : f32
    %188 = vector.broadcast %cst_64 : f32 to vector<2x8x1xf32>
    %189 = arith.addf %185, %188 : vector<2x8x1xf32>
    %190 = math.rsqrt %189 : vector<2x8x1xf32>
    %191 = vector.broadcast %190 : vector<2x8x1xf32> to vector<2x8x32xf32>
    %192 = arith.mulf %187, %191 : vector<2x8x32xf32>
    %c3 = arith.constant 3 : index
    %c0_65 = arith.constant 0 : index
    %c0_66 = arith.constant 0 : index
    %193 = vector.load %arg5[%c3, %c0_65, %c0_66] : memref<4x1x32xf32, #tpu.memory_space<vmem>>, vector<1x1x32xf32>
    %194 = vector.shape_cast %193 : vector<1x1x32xf32> to vector<1x32xf32>
    %195 = vector.shape_cast %194 : vector<1x32xf32> to vector<1x1x32xf32>
    %196 = vector.broadcast %195 : vector<1x1x32xf32> to vector<2x8x32xf32>
    %197 = arith.mulf %192, %196 : vector<2x8x32xf32>
    %c3_67 = arith.constant 3 : index
    %c0_68 = arith.constant 0 : index
    %c0_69 = arith.constant 0 : index
    %198 = vector.load %arg6[%c3_67, %c0_68, %c0_69] : memref<4x1x32xf32, #tpu.memory_space<vmem>>, vector<1x1x32xf32>
    %199 = vector.shape_cast %198 : vector<1x1x32xf32> to vector<1x32xf32>
    %200 = vector.shape_cast %199 : vector<1x32xf32> to vector<1x1x32xf32>
    %201 = vector.broadcast %200 : vector<1x1x32xf32> to vector<2x8x32xf32>
    %202 = arith.addf %197, %201 : vector<2x8x32xf32>
    %cst_70 = arith.constant 0.000000e+00 : f32
    %203 = vector.broadcast %cst_70 : f32 to vector<2x8x32xf32>
    %204 = arith.maximumf %202, %203 : vector<2x8x32xf32>
    %205 = arith.addf %156, %204 : vector<2x8x32xf32>
    %c0_71 = arith.constant 0 : index
    %c0_72 = arith.constant 0 : index
    %c0_73 = arith.constant 0 : index
    %206 = vector.load %arg8[%c0_71, %c0_72, %c0_73] : memref<2x8x8xf32, #tpu.memory_space<vmem>>, vector<2x8x8xf32>
    tpu.vector_store %arg8[%c0_71, %c0_72, %c0_73], %171 {strides = array<i32>} : memref<2x8x8xf32, #tpu.memory_space<vmem>>, vector<2x8x8xf32>,
    %c0_74 = arith.constant 0 : index
    %c0_75 = arith.constant 0 : index
    %c0_76 = arith.constant 0 : index
    %207 = vector.load %arg7[%c0_74, %c0_75, %c0_76] : memref<2x8x32xf32, #tpu.memory_space<vmem>>, vector<2x8x32xf32>
    tpu.vector_store %arg7[%c0_74, %c0_75, %c0_76], %205 {strides = array<i32>} : memref<2x8x32xf32, #tpu.memory_space<vmem>>, vector<2x8x32xf32>,
    return
  }
  func.func @transform_0(%arg0: i32) -> (i32, i32, i32) {
    %c0_i32 = arith.constant 0 : i32
    %c0_i32_0 = arith.constant 0 : i32
    %c0_i32_1 = arith.constant 0 : i32
    return %arg0, %c0_i32, %c0_i32_0 : i32, i32, i32
  }
  func.func @transform_1(%arg0: i32) -> (i32, i32, i32) {
    %c0_i32 = arith.constant 0 : i32
    %c0_i32_0 = arith.constant 0 : i32
    %c0_i32_1 = arith.constant 0 : i32
    return %arg0, %c0_i32, %c0_i32_0 : i32, i32, i32
  }
  func.func @transform_2(%arg0: i32) -> (i32, i32) {
    %c0_i32 = arith.constant 0 : i32
    %c0_i32_0 = arith.constant 0 : i32
    %c0_i32_1 = arith.constant 0 : i32
    return %c0_i32, %c0_i32_0 : i32, i32
  }
  func.func @transform_3(%arg0: i32) -> (i32, i32) {
    %c0_i32 = arith.constant 0 : i32
    %c0_i32_0 = arith.constant 0 : i32
    %c0_i32_1 = arith.constant 0 : i32
    return %c0_i32, %c0_i32_0 : i32, i32
  }
  func.func @transform_4(%arg0: i32) -> (i32, i32, i32) {
    %c0_i32 = arith.constant 0 : i32
    %c0_i32_0 = arith.constant 0 : i32
    %c0_i32_1 = arith.constant 0 : i32
    %c0_i32_2 = arith.constant 0 : i32
    return %c0_i32, %c0_i32_0, %c0_i32_1 : i32, i32, i32
  }
  func.func @transform_5(%arg0: i32) -> (i32, i32, i32) {
    %c0_i32 = arith.constant 0 : i32
    %c0_i32_0 = arith.constant 0 : i32
    %c0_i32_1 = arith.constant 0 : i32
    %c0_i32_2 = arith.constant 0 : i32
    return %c0_i32, %c0_i32_0, %c0_i32_1 : i32, i32, i32
  }
  func.func @transform_6(%arg0: i32) -> (i32, i32, i32) {
    %c0_i32 = arith.constant 0 : i32
    %c0_i32_0 = arith.constant 0 : i32
    %c0_i32_1 = arith.constant 0 : i32
    return %arg0, %c0_i32, %c0_i32_0 : i32, i32, i32
  }
  func.func @transform_7(%arg0: i32) -> (i32, i32, i32) {
    %c0_i32 = arith.constant 0 : i32
    %c0_i32_0 = arith.constant 0 : i32
    %c0_i32_1 = arith.constant 0 : i32
    return %arg0, %c0_i32, %c0_i32_0 : i32, i32, i32
  }
}

</mosaic_0001>

<llo_original>
// kernel: tpu_custom_call.1
$region0: #{tpu_custom_call.1}
  #allocation0 [shape = 'u32[]', space=smem, size = 0x4, offset = 0x4, fixed_abs, tag = 'smem constant byte address 0x4 - core index']
  #allocation1 [shape = 'u32[144,128]{1,0:T(1,128)}', space=vmem, size = 0x12000, scoped, tag = 'internal scratch']
  %s0 = inlined_call_operand.hbm [shape: f32[2,8,32], index: 0, kind: input, shape index: {}]
  %s1 = inlined_call_operand.hbm [shape: f32[2,8,8], index: 1, kind: input, shape index: {}]
  %s2 = inlined_call_operand.hbm [shape: f32[32,384], index: 2, kind: input, shape index: {}]
  %s3 = inlined_call_operand.vmem [shape: f32[1,384], index: 3, kind: input, shape index: {}]
  %s4 = inlined_call_operand.vmem [shape: f32[4,1,32], index: 4, kind: input, shape index: {}]
  %s5 = inlined_call_operand.vmem [shape: f32[4,1,32], index: 5, kind: input, shape index: {}]
  %s6 = inlined_call_operand.hbm [shape: f32[2,8,32], index: 6, kind: output, shape index: {0}]
  %s7 = inlined_call_operand.hbm [shape: f32[2,8,8], index: 7, kind: output, shape index: {1}]
  %8 = xla_tuple %s6, %s7
  %s9 = sld [smem:[#allocation0]]
  $region54: #{tpu_custom_call.1} parent=0
    _
  %s11 = ssub.s32 1, %s9
  %s12 = scalar_select 0, %s11, %s9
  $region1: #{tpu_custom_call.1} parent=0
    #allocation2 [shape = 'u8[8192]{0}', space=vmem, size = 0x2000, scoped, tag = 'input window, operand 0, single buffered']
    #allocation3 [shape = 's32[1]{0}', space=sflag, size = 0x4, scoped, tag = 'scoped memory for tpu_custom_call.1']
    #allocation4 [shape = 's32[1]{0}', space=sflag, size = 0x4, scoped, tag = 'scoped memory for tpu_custom_call.1']
    #allocation5 [shape = 'u8[8192]{0}', space=vmem, size = 0x2000, scoped, tag = 'input window, operand 1, single buffered']
    #allocation6 [shape = 's32[1]{0}', space=sflag, size = 0x4, scoped, tag = 'scoped memory for tpu_custom_call.1']
    #allocation7 [shape = 'u8[49152]{0}', space=vmem, size = 0xc000, scoped, tag = 'input window, operand 2, single buffered']
    #allocation8 [shape = 'u8[8192]{0}', space=vmem, size = 0x2000, scoped, tag = 'output window, operand 0, single buffered']
    #allocation9 [shape = 'u8[8192]{0}', space=vmem, size = 0x2000, scoped, tag = 'output window, operand 1, single buffered']
    #allocation10 [shape = 's32[1]{0}', space=sflag, size = 0x4, scoped, tag = 'scoped memory for tpu_custom_call.1']
    %13 = vsyncpa [#allocation3], 0
    %14 = vsyncpa [#allocation6], 0
    %15 = vsyncpa [#allocation4], 0
    %16 = vsyncpa [#allocation10], 0
    // Predicated region
    $region2: #{tpu_custom_call.1} parent=1 // pred_check
      _
    $region3: #{tpu_custom_call.1} parent=1 // pred_check_branch
      %18 = sbr.rel (0) target = $region5
    $region4: #{tpu_custom_call.1} parent=1 // pred_region
      %s20 = ssub.s32 256, 256
      %21 = vsyncadd [#allocation3], %s20
      %s22 = sshll.u32 [#allocation2], 4
      %s23 = int_to_ptr.vmem [resolvable:$true] %s22
      %28 = dma.hbm_to_vmem [thread:$0]  %s0, 256, %s23, [#allocation3], 128, 128, 8
    $region5: #{tpu_custom_call.1} parent=1 // pred_fallthru
      _
    // Predicated region
    $region6: #{tpu_custom_call.1} parent=1 // pred_check
      _
    $region7: #{tpu_custom_call.1} parent=1 // pred_check_branch
      %30 = sbr.rel (0) target = $region9
    $region8: #{tpu_custom_call.1} parent=1 // pred_region
      %s32 = ssub.s32 256, 256
      %33 = vsyncadd [#allocation6], %s32
      %s34 = sshll.u32 [#allocation5], 4
      %s35 = int_to_ptr.vmem [resolvable:$true] %s34
      %40 = dma.hbm_to_vmem [thread:$0]  %s1, 256, %s35, [#allocation6], 128, 128, 8
    $region9: #{tpu_custom_call.1} parent=1 // pred_fallthru
      _
    // Predicated region
    $region10: #{tpu_custom_call.1} parent=1 // pred_check
      _
    $region11: #{tpu_custom_call.1} parent=1 // pred_check_branch
      %42 = sbr.rel (0) target = $region13
    $region12: #{tpu_custom_call.1} parent=1 // pred_region
      %s44 = ssub.s32 1536, 1536
      %45 = vsyncadd [#allocation6], %s44
      %s46 = sshll.u32 [#allocation7], 4
      %s47 = int_to_ptr.vmem [resolvable:$true] %s46
      %52 = dma.hbm_to_vmem [thread:$0]  %s2, 1536, %s47, [#allocation6], 384, 384, 24
    $region13: #{tpu_custom_call.1} parent=1 // pred_fallthru
      _
    // Predicated region
    $region14: #{tpu_custom_call.1} parent=1 // pred_check
      _
    $region15: #{tpu_custom_call.1} parent=1 // pred_check_branch
      %54 = sbr.rel (0) target = $region17
    $region16: #{tpu_custom_call.1} parent=1 // pred_region
      _
    $region17: #{tpu_custom_call.1} parent=1 // pred_fallthru
      _
    // Predicated region
    $region18: #{tpu_custom_call.1} parent=1 // pred_check
      _
    $region19: #{tpu_custom_call.1} parent=1 // pred_check_branch
      %56 = sbr.rel (0) target = $region21
    $region20: #{tpu_custom_call.1} parent=1 // pred_region
      _
    $region21: #{tpu_custom_call.1} parent=1 // pred_fallthru
      _
    // Predicated region
    $region22: #{tpu_custom_call.1} parent=1 // pred_check
      _
    $region23: #{tpu_custom_call.1} parent=1 // pred_check_branch
      %58 = sbr.rel (0) target = $region25
    $region24: #{tpu_custom_call.1} parent=1 // pred_region
      _
    $region25: #{tpu_custom_call.1} parent=1 // pred_fallthru
      _
    // Predicated region
    $region26: #{tpu_custom_call.1} parent=1 // pred_check
      _
    $region27: #{tpu_custom_call.1} parent=1 // pred_check_branch
      %60 = sbr.rel (0) target = $region29
    $region28: #{tpu_custom_call.1} parent=1 // pred_region
      %61 = dma.done [#allocation3], 256
    $region29: #{tpu_custom_call.1} parent=1 // pred_fallthru
      _
    // Predicated region
    $region30: #{tpu_custom_call.1} parent=1 // pred_check
      _
    $region31: #{tpu_custom_call.1} parent=1 // pred_check_branch
      %63 = sbr.rel (0) target = $region33
    $region32: #{tpu_custom_call.1} parent=1 // pred_region
      %64 = dma.done [#allocation6], 256
    $region33: #{tpu_custom_call.1} parent=1 // pred_fallthru
      _
    // Predicated region
    $region34: #{tpu_custom_call.1} parent=1 // pred_check
      _
    $region35: #{tpu_custom_call.1} parent=1 // pred_check_branch
      %66 = sbr.rel (0) target = $region37
    $region36: #{tpu_custom_call.1} parent=1 // pred_region
      %67 = dma.done [#allocation6], 1536
    $region37: #{tpu_custom_call.1} parent=1 // pred_fallthru
      _
    %v68 = vld [vmem:[#allocation2] sm:$0xff]
    %v69 = vld [vmem:[#allocation2 + $0x8] sm:$0xff]
    %v70 = vld [vmem:[#allocation7] sm:$0xff]
    %v71 = vld [vmem:[#allocation7 + $0x8] sm:$0xff]
    %v72 = vld [vmem:[#allocation7 + $0x10] sm:$0xff]
    %v73 = vld [vmem:[#allocation7 + $0x18] sm:$0xff]
    %v74 = vld [vmem:[#allocation7 + $0x20] sm:$0xff]
    %v75 = vld [vmem:[#allocation7 + $0x28] sm:$0xff]
    %v76 = vld [vmem:[#allocation7 + $0x30] sm:$0xff]
    %v77 = vld [vmem:[#allocation7 + $0x38] sm:$0xff]
    %v78 = vld [vmem:[#allocation7 + $0x40] sm:$0xff]
    %v79 = vld [vmem:[#allocation7 + $0x48] sm:$0xff]
    %v80 = vld [vmem:[#allocation7 + $0x50] sm:$0xff]
    %v81 = vld [vmem:[#allocation7 + $0x58] sm:$0xff]
    %v82 = vld [vmem:[%s3] sm:$0x7]
    %v84 = vlaneseq
    %v85 = vshrl.u32 %v84, 7
    %v86 = vsub.s32 0, %v85
    %v87 = vrot.slane %v82, %v86
    %v88 = vlaneseq
    %v89 = vshrl.u32 %v88, 7
    %v90 = vsub.s32 1, %v89
    %v91 = vrot.slane %v82, %v90
    %v92 = vlaneseq
    %v93 = vshrl.u32 %v92, 7
    %v94 = vsub.s32 2, %v93
    %v95 = vrot.slane %v82, %v94
    %vm99 = vcmask 261120
    %v101 = vsel %vm99, %v68, 0
    %v104 = vsel %vm99, %v69, 0
    %106 = vmatprep.subr.mxu0 %v71
    %107 = vmatpush1.msra.mxu0 %v70
    %108 = vmatprep.subr.mxu0 %v74
    %109 = vmatpush1.msra.mxu0 %v73
    %110 = vmatprep.subr.mxu0 %v77
    %111 = vmatpush1.msra.mxu0 %v76
    %112 = vmatprep.subr.mxu0 %v80
    %113 = vmatpush1.msra.mxu0 %v79
    %114 = vmatprep.subr.mxu0 0.0
    %115 = vmatpush1.msra.mxu0 0.0
    %116 = vmatprep.subr.mxu0 0.0
    %117 = vmatpush1.msra.mxu0 0.0
    %118 = vmatprep.subr.mxu0 0.0
    %119 = vmatpush1.msra.mxu0 0.0
    %120 = vmatprep.subr.mxu0 0.0
    %121 = vmatpush1.msra.mxu0 0.0
    %122 = vmatprep.subr.mxu0 0.0
    %123 = vmatpush1.msra.mxu0 0.0
    %124 = vmatprep.subr.mxu0 0.0
    %125 = vmatpush1.msra.mxu0 0.0
    %126 = vmatprep.subr.mxu0 0.0
    %127 = vmatpush1.msra.mxu0 0.0
    %128 = vmatprep.subr.mxu0 0.0
    %129 = vmatpush1.msra.mxu0 0.0
    %130 = vmatprep.subr.mxu0 0.0
    %131 = vmatpush1.msra.mxu0 0.0
    %132 = vmatprep.subr.mxu0 0.0
    %133 = vmatpush1.msra.mxu0 0.0
    %134 = vmatprep.subr.mxu0 0.0
    %135 = vmatpush1.msra.mxu0 0.0
    %136 = vmatprep.subr.mxu0 0.0
    %137 = vmatpush1.msra.mxu0 0.0
    %138 = vmatprep.subr.mxu0 0.0
    %139 = vmatpush1.msra.mxu0 0.0
    %140 = vmatprep.subr.mxu0 0.0
    %141 = vmatpush1.msra.mxu0 0.0
    %142 = vmatprep.subr.mxu0 0.0
    %143 = vmatpush1.msra.mxu0 0.0
    %144 = vmatprep.subr.mxu0 0.0
    %145 = vmatpush1.msra.mxu0 0.0
    %146 = vmatprep.subr.mxu0 0.0
    %147 = vmatpush1.msra.mxu0 0.0
    %148 = vmatprep.subr.mxu0 0.0
    %149 = vmatpush1.msra.mxu0 0.0
    %150 = vmatprep.subr.mxu0 0.0
    %151 = vmatpush1.msra.mxu0 0.0
    %152 = vmatprep.subr.mxu0 0.0
    %153 = vmatpush1.msra.mxu0 0.0
    %154 = vmatprep.subr.mxu0 0.0
    %155 = vmatpush1.msra.mxu0 0.0
    %156 = vmatprep.subr.mxu0 0.0
    %157 = vmatpush1.msra.mxu0 0.0
    %158 = vmatprep.subr.mxu0 0.0
    %159 = vmatpush1.msra.mxu0 0.0
    %160 = vmatprep.subr.mxu0 0.0
    %161 = vmatpush1.msra.mxu0 0.0
    %162 = vmatprep.subr.mxu0 0.0
    %163 = vmatpush1.msra.mxu0 0.0
    %164 = vmatprep.subr.mxu0 0.0
    %165 = vmatpush1.msra.mxu0 0.0
    %166 = vmatprep.subr.mxu0 0.0
    %167 = vmatpush1.msra.mxu0 0.0
    %168 = vmatprep.subr.mxu0 0.0
    %169 = vmatpush1.msra.mxu0 0.0
    %170 = vmatprep.mubr.f32.mxu0 0.0
    %171 = vmatmul.mubr.f32.gmra.mrb[0].mxu0 %v101
    %v172 = vpop.f32.mrb[0].mxu0
    %v173 = vadd.f32 %v87, %v172
    %v174 = vpop.f32.mrb[0].mxu0
    %v175 = vadd.f32 %v91, %v174
    %176 = vmatprep.mubr.f32.mxu0 0.0
    %177 = vmatmul.mubr.f32.gmra.mrb[0].mxu0 %v104
    %v178 = vpop.f32.mrb[0].mxu0
    %v179 = vadd.f32 %v87, %v178
    %v180 = vpop.f32.mrb[0].mxu0
    %v181 = vadd.f32 %v91, %v180
    %182 = vdwg.mxu0
    %183 = vmatprep.subr.mxu0 0.0
    %184 = vmatpush1.msra.mxu0 %v72
    %185 = vmatprep.subr.mxu0 0.0
    %186 = vmatpush1.msra.mxu0 %v75
    %187 = vmatprep.subr.mxu0 0.0
    %188 = vmatpush1.msra.mxu0 %v78
    %189 = vmatprep.subr.mxu0 0.0
    %190 = vmatpush1.msra.mxu0 %v81
    %191 = vmatprep.subr.mxu0 0.0
    %192 = vmatpush1.msra.mxu0 0.0
    %193 = vmatprep.subr.mxu0 0.0
    %194 = vmatpush1.msra.mxu0 0.0
    %195 = vmatprep.subr.mxu0 0.0
    %196 = vmatpush1.msra.mxu0 0.0
    %197 = vmatprep.subr.mxu0 0.0
    %198 = vmatpush1.msra.mxu0 0.0
    %199 = vmatprep.subr.mxu0 0.0
    %200 = vmatpush1.msra.mxu0 0.0
    %201 = vmatprep.subr.mxu0 0.0
    %202 = vmatpush1.msra.mxu0 0.0
    %203 = vmatprep.subr.mxu0 0.0
    %204 = vmatpush1.msra.mxu0 0.0
    %205 = vmatprep.subr.mxu0 0.0
    %206 = vmatpush1.msra.mxu0 0.0
    %207 = vmatprep.subr.mxu0 0.0
    %208 = vmatpush1.msra.mxu0 0.0
    %209 = vmatprep.subr.mxu0 0.0
    %210 = vmatpush1.msra.mxu0 0.0
    %211 = vmatprep.subr.mxu0 0.0
    %212 = vmatpush1.msra.mxu0 0.0
    %213 = vmatprep.subr.mxu0 0.0
    %214 = vmatpush1.msra.mxu0 0.0
    %215 = vmatprep.subr.mxu0 0.0
    %216 = vmatpush1.msra.mxu0 0.0
    %217 = vmatprep.subr.mxu0 0.0
    %218 = vmatpush1.msra.mxu0 0.0
    %219 = vmatprep.subr.mxu0 0.0
    %220 = vmatpush1.msra.mxu0 0.0
    %221 = vmatprep.subr.mxu0 0.0
    %222 = vmatpush1.msra.mxu0 0.0
    %223 = vmatprep.subr.mxu0 0.0
    %224 = vmatpush1.msra.mxu0 0.0
    %225 = vmatprep.subr.mxu0 0.0
    %226 = vmatpush1.msra.mxu0 0.0
    %227 = vmatprep.subr.mxu0 0.0
    %228 = vmatpush1.msra.mxu0 0.0
    %229 = vmatprep.subr.mxu0 0.0
    %230 = vmatpush1.msra.mxu0 0.0
    %231 = vmatprep.subr.mxu0 0.0
    %232 = vmatpush1.msra.mxu0 0.0
    %233 = vmatprep.subr.mxu0 0.0
    %234 = vmatpush1.msra.mxu0 0.0
    %235 = vmatprep.subr.mxu0 0.0
    %236 = vmatpush1.msra.mxu0 0.0
    %237 = vmatprep.subr.mxu0 0.0
    %238 = vmatpush1.msra.mxu0 0.0
    %239 = vmatprep.subr.mxu0 0.0
    %240 = vmatpush1.msra.mxu0 0.0
    %241 = vmatprep.subr.mxu0 0.0
    %242 = vmatpush1.msra.mxu0 0.0
    %243 = vmatprep.subr.mxu0 0.0
    %244 = vmatpush1.msra.mxu0 0.0
    %245 = vmatprep.subr.mxu0 0.0
    %246 = vmatpush1.msra.mxu0 0.0
    %247 = vmatprep.mubr.f32.mxu0 0.0
    %248 = vmatmul.mubr.f32.gmra.mrb[0].mxu0 %v101
    %v249 = vpop.f32.mrb[0].mxu0
    %v250 = vadd.f32 %v95, %v249
    %v251 = vpop.f32.mrb[0].mxu0
    %252 = vmatprep.mubr.f32.mxu0 0.0
    %253 = vmatmul.mubr.f32.gmra.mrb[0].mxu0 %v104
    %v254 = vpop.f32.mrb[0].mxu0
    %v255 = vadd.f32 %v95, %v254
    %v256 = vpop.f32.mrb[0].mxu0
    %257 = vdwg.mxu0
    %v258 = vld [vmem:[#allocation5] sm:$0xff]
    %v259 = vld [vmem:[#allocation5 + $0x8] sm:$0xff]
    %v261 = vsel %vm99, %v173, 0
    %v264 = vsel %vm99, %v175, 0
    %266 = vmatprep.subr.mxu0 0.0
    %267 = vmatpush1.xpose.msra.mxu0 %v264
    %268 = vmatprep.subr.mxu0 0.0
    %269 = vmatpush1.xpose.msra.mxu0 0.0
    %270 = vmatprep.subr.mxu0 0.0
    %271 = vmatpush1.xpose.msra.mxu0 0.0
    %272 = vmatprep.subr.mxu0 0.0
    %273 = vmatpush1.xpose.msra.mxu0 0.0
    %274 = vmatprep.subr.mxu0 0.0
    %275 = vmatpush1.xpose.msra.mxu0 0.0
    %276 = vmatprep.subr.mxu0 0.0
    %277 = vmatpush1.xpose.msra.mxu0 0.0
    %278 = vmatprep.subr.mxu0 0.0
    %279 = vmatpush1.xpose.msra.mxu0 0.0
    %280 = vmatprep.subr.mxu0 0.0
    %281 = vmatpush1.xpose.msra.mxu0 0.0
    %282 = vmatprep.subr.mxu0 0.0
    %283 = vmatpush1.xpose.msra.mxu0 0.0
    %284 = vmatprep.subr.mxu0 0.0
    %285 = vmatpush1.xpose.msra.mxu0 0.0
    %286 = vmatprep.subr.mxu0 0.0
    %287 = vmatpush1.xpose.msra.mxu0 0.0
    %288 = vmatprep.subr.mxu0 0.0
    %289 = vmatpush1.xpose.msra.mxu0 0.0
    %290 = vmatprep.subr.mxu0 0.0
    %291 = vmatpush1.xpose.msra.mxu0 0.0
    %292 = vmatprep.subr.mxu0 0.0
    %293 = vmatpush1.xpose.msra.mxu0 0.0
    %294 = vmatprep.subr.mxu0 0.0
    %295 = vmatpush1.xpose.msra.mxu0 0.0
    %296 = vmatprep.subr.mxu0 0.0
    %297 = vmatpush1.xpose.msra.mxu0 0.0
    %298 = vmatprep.subr.mxu0 0.0
    %299 = vmatpush1.xpose.msra.mxu0 0.0
    %300 = vmatprep.subr.mxu0 0.0
    %301 = vmatpush1.xpose.msra.mxu0 0.0
    %302 = vmatprep.subr.mxu0 0.0
    %303 = vmatpush1.xpose.msra.mxu0 0.0
    %304 = vmatprep.subr.mxu0 0.0
    %305 = vmatpush1.xpose.msra.mxu0 0.0
    %306 = vmatprep.subr.mxu0 0.0
    %307 = vmatpush1.xpose.msra.mxu0 0.0
    %308 = vmatprep.subr.mxu0 0.0
    %309 = vmatpush1.xpose.msra.mxu0 0.0
    %310 = vmatprep.subr.mxu0 0.0
    %311 = vmatpush1.xpose.msra.mxu0 0.0
    %312 = vmatprep.subr.mxu0 0.0
    %313 = vmatpush1.xpose.msra.mxu0 0.0
    %314 = vmatprep.subr.mxu0 0.0
    %315 = vmatpush1.xpose.msra.mxu0 0.0
    %316 = vmatprep.subr.mxu0 0.0
    %317 = vmatpush1.xpose.msra.mxu0 0.0
    %318 = vmatprep.subr.mxu0 0.0
    %319 = vmatpush1.xpose.msra.mxu0 0.0
    %320 = vmatprep.subr.mxu0 0.0
    %321 = vmatpush1.xpose.msra.mxu0 0.0
    %322 = vmatprep.subr.mxu0 0.0
    %323 = vmatpush1.xpose.msra.mxu0 0.0
    %324 = vmatprep.subr.mxu0 0.0
    %325 = vmatpush1.xpose.msra.mxu0 0.0
    %326 = vmatprep.subr.mxu0 0.0
    %327 = vmatpush1.xpose.msra.mxu0 0.0
    %328 = vmatprep.subr.mxu0 0.0
    %329 = vmatpush1.xpose.msra.mxu0 0.0
    %330 = vmatprep.mubr.f32.mxu0 0.0
    %331 = vmatmul.mubr.f32.gmra.mrb[0].mxu0 %v261
    %v332 = vpop.f32.mrb[0].mxu0
    %v333 = vadd.f32 %v258, %v332
    %v334 = vpop.f32.mrb[0].mxu0
    %335 = vdwg.mxu0
    %v337 = vsel %vm99, %v179, 0
    %v340 = vsel %vm99, %v181, 0
    %342 = vmatprep.subr.mxu0 0.0
    %343 = vmatpush1.xpose.msra.mxu0 %v340
    %344 = vmatprep.subr.mxu0 0.0
    %345 = vmatpush1.xpose.msra.mxu0 0.0
    %346 = vmatprep.subr.mxu0 0.0
    %347 = vmatpush1.xpose.msra.mxu0 0.0
    %348 = vmatprep.subr.mxu0 0.0
    %349 = vmatpush1.xpose.msra.mxu0 0.0
    %350 = vmatprep.subr.mxu0 0.0
    %351 = vmatpush1.xpose.msra.mxu0 0.0
    %352 = vmatprep.subr.mxu0 0.0
    %353 = vmatpush1.xpose.msra.mxu0 0.0
    %354 = vmatprep.subr.mxu0 0.0
    %355 = vmatpush1.xpose.msra.mxu0 0.0
    %356 = vmatprep.subr.mxu0 0.0
    %357 = vmatpush1.xpose.msra.mxu0 0.0
    %358 = vmatprep.subr.mxu0 0.0
    %359 = vmatpush1.xpose.msra.mxu0 0.0
    %360 = vmatprep.subr.mxu0 0.0
    %361 = vmatpush1.xpose.msra.mxu0 0.0
    %362 = vmatprep.subr.mxu0 0.0
    %363 = vmatpush1.xpose.msra.mxu0 0.0
    %364 = vmatprep.subr.mxu0 0.0
    %365 = vmatpush1.xpose.msra.mxu0 0.0
    %366 = vmatprep.subr.mxu0 0.0
    %367 = vmatpush1.xpose.msra.mxu0 0.0
    %368 = vmatprep.subr.mxu0 0.0
    %369 = vmatpush1.xpose.msra.mxu0 0.0
    %370 = vmatprep.subr.mxu0 0.0
    %371 = vmatpush1.xpose.msra.mxu0 0.0
    %372 = vmatprep.subr.mxu0 0.0
    %373 = vmatpush1.xpose.msra.mxu0 0.0
    %374 = vmatprep.subr.mxu0 0.0
    %375 = vmatpush1.xpose.msra.mxu0 0.0
    %376 = vmatprep.subr.mxu0 0.0
    %377 = vmatpush1.xpose.msra.mxu0 0.0
    %378 = vmatprep.subr.mxu0 0.0
    %379 = vmatpush1.xpose.msra.mxu0 0.0
    %380 = vmatprep.subr.mxu0 0.0
    %381 = vmatpush1.xpose.msra.mxu0 0.0
    %382 = vmatprep.subr.mxu0 0.0
    %383 = vmatpush1.xpose.msra.mxu0 0.0
    %384 = vmatprep.subr.mxu0 0.0
    %385 = vmatpush1.xpose.msra.mxu0 0.0
    %386 = vmatprep.subr.mxu0 0.0
    %387 = vmatpush1.xpose.msra.mxu0 0.0
    %388 = vmatprep.subr.mxu0 0.0
    %389 = vmatpush1.xpose.msra.mxu0 0.0
    %390 = vmatprep.subr.mxu0 0.0
    %391 = vmatpush1.xpose.msra.mxu0 0.0
    %392 = vmatprep.subr.mxu0 0.0
    %393 = vmatpush1.xpose.msra.mxu0 0.0
    %394 = vmatprep.subr.mxu0 0.0
    %395 = vmatpush1.xpose.msra.mxu0 0.0
    %396 = vmatprep.subr.mxu0 0.0
    %397 = vmatpush1.xpose.msra.mxu0 0.0
    %398 = vmatprep.subr.mxu0 0.0
    %399 = vmatpush1.xpose.msra.mxu0 0.0
    %400 = vmatprep.subr.mxu0 0.0
    %401 = vmatpush1.xpose.msra.mxu0 0.0
    %402 = vmatprep.subr.mxu0 0.0
    %403 = vmatpush1.xpose.msra.mxu0 0.0
    %404 = vmatprep.subr.mxu0 0.0
    %405 = vmatpush1.xpose.msra.mxu0 0.0
    %406 = vmatprep.mubr.f32.mxu0 0.0
    %407 = vmatmul.mubr.f32.gmra.mrb[0].mxu0 %v337
    %v408 = vpop.f32.mrb[0].mxu0
    %v409 = vadd.f32 %v259, %v408
    %v410 = vpop.f32.mrb[0].mxu0
    %411 = vdwg.mxu0
    %vm412 = vcmask 64512
    %v413 = vsel %vm412, %v333, -inf
    %414 = vmax.xlane.f32.xlu0 %v413
    %v415 = vpop.xlane.xlu0 %414
    %v416 = vsel %vm412, %v409, -inf
    %417 = vmax.xlane.f32.xlu0 %v416
    %v418 = vpop.xlane.xlu0 %417
    %v419 = vsub.f32 %v333, %v415
    %v420 = vsub.f32 %v409, %v418
    %v421 = vmul.f32 %v419, 1.442695
    %v422 = vpow.pop %v421
    %v423 = vmul.f32 %v420, 1.442695
    %v424 = vpow.pop %v423
    %v425 = vsel %vm412, %v422, 0.0
    %426 = vadd.xlane.f32.xlu0 %v425
    %v427 = vpop.xlane.xlu0 %426
    %v428 = vsel %vm412, %v424, 0.0
    %429 = vadd.xlane.f32.xlu0 %v428
    %v430 = vpop.xlane.xlu0 %429
    %v431 = vrcp.pop %v427
    %v432 = vrcp.pop %v430
    %v433 = vmul.f32 %v422, %v431
    %v434 = vmul.f32 %v424, %v432
    %v436 = vsel %vm412, %v433, 0
    %438 = vmatprep.subr.mxu0 0.0
    %439 = vmatpush1.msra.mxu0 %v250
    %440 = vmatprep.subr.mxu0 0.0
    %441 = vmatpush1.msra.mxu0 0.0
    %442 = vmatprep.subr.mxu0 0.0
    %443 = vmatpush1.msra.mxu0 0.0
    %444 = vmatprep.subr.mxu0 0.0
    %445 = vmatpush1.msra.mxu0 0.0
    %446 = vmatprep.subr.mxu0 0.0
    %447 = vmatpush1.msra.mxu0 0.0
    %448 = vmatprep.subr.mxu0 0.0
    %449 = vmatpush1.msra.mxu0 0.0
    %450 = vmatprep.subr.mxu0 0.0
    %451 = vmatpush1.msra.mxu0 0.0
    %452 = vmatprep.subr.mxu0 0.0
    %453 = vmatpush1.msra.mxu0 0.0
    %454 = vmatprep.subr.mxu0 0.0
    %455 = vmatpush1.msra.mxu0 0.0
    %456 = vmatprep.subr.mxu0 0.0
    %457 = vmatpush1.msra.mxu0 0.0
    %458 = vmatprep.subr.mxu0 0.0
    %459 = vmatpush1.msra.mxu0 0.0
    %460 = vmatprep.subr.mxu0 0.0
    %461 = vmatpush1.msra.mxu0 0.0
    %462 = vmatprep.subr.mxu0 0.0
    %463 = vmatpush1.msra.mxu0 0.0
    %464 = vmatprep.subr.mxu0 0.0
    %465 = vmatpush1.msra.mxu0 0.0
    %466 = vmatprep.subr.mxu0 0.0
    %467 = vmatpush1.msra.mxu0 0.0
    %468 = vmatprep.subr.mxu0 0.0
    %469 = vmatpush1.msra.mxu0 0.0
    %470 = vmatprep.subr.mxu0 0.0
    %471 = vmatpush1.msra.mxu0 0.0
    %472 = vmatprep.subr.mxu0 0.0
    %473 = vmatpush1.msra.mxu0 0.0
    %474 = vmatprep.subr.mxu0 0.0
    %475 = vmatpush1.msra.mxu0 0.0
    %476 = vmatprep.subr.mxu0 0.0
    %477 = vmatpush1.msra.mxu0 0.0
    %478 = vmatprep.subr.mxu0 0.0
    %479 = vmatpush1.msra.mxu0 0.0
    %480 = vmatprep.subr.mxu0 0.0
    %481 = vmatpush1.msra.mxu0 0.0
    %482 = vmatprep.subr.mxu0 0.0
    %483 = vmatpush1.msra.mxu0 0.0
    %484 = vmatprep.subr.mxu0 0.0
    %485 = vmatpush1.msra.mxu0 0.0
    %486 = vmatprep.subr.mxu0 0.0
    %487 = vmatpush1.msra.mxu0 0.0
    %488 = vmatprep.subr.mxu0 0.0
    %489 = vmatpush1.msra.mxu0 0.0
    %490 = vmatprep.subr.mxu0 0.0
    %491 = vmatpush1.msra.mxu0 0.0
    %492 = vmatprep.subr.mxu0 0.0
    %493 = vmatpush1.msra.mxu0 0.0
    %494 = vmatprep.subr.mxu0 0.0
    %495 = vmatpush1.msra.mxu0 0.0
    %496 = vmatprep.subr.mxu0 0.0
    %497 = vmatpush1.msra.mxu0 0.0
    %498 = vmatprep.subr.mxu0 0.0
    %499 = vmatpush1.msra.mxu0 0.0
    %500 = vmatprep.subr.mxu0 0.0
    %501 = vmatpush1.msra.mxu0 0.0
    %502 = vmatprep.mubr.f32.mxu0 0.0
    %503 = vmatmul.mubr.f32.gmra.mrb[0].mxu0 %v436
    %v504 = vpop.f32.mrb[0].mxu0
    %v505 = vadd.f32 0.0, %v504
    %v506 = vpop.f32.mrb[0].mxu0
    %507 = vdwg.mxu0
    %v509 = vsel %vm412, %v434, 0
    %511 = vmatprep.subr.mxu0 0.0
    %512 = vmatpush1.msra.mxu0 %v255
    %513 = vmatprep.subr.mxu0 0.0
    %514 = vmatpush1.msra.mxu0 0.0
    %515 = vmatprep.subr.mxu0 0.0
    %516 = vmatpush1.msra.mxu0 0.0
    %517 = vmatprep.subr.mxu0 0.0
    %518 = vmatpush1.msra.mxu0 0.0
    %519 = vmatprep.subr.mxu0 0.0
    %520 = vmatpush1.msra.mxu0 0.0
    %521 = vmatprep.subr.mxu0 0.0
    %522 = vmatpush1.msra.mxu0 0.0
    %523 = vmatprep.subr.mxu0 0.0
    %524 = vmatpush1.msra.mxu0 0.0
    %525 = vmatprep.subr.mxu0 0.0
    %526 = vmatpush1.msra.mxu0 0.0
    %527 = vmatprep.subr.mxu0 0.0
    %528 = vmatpush1.msra.mxu0 0.0
    %529 = vmatprep.subr.mxu0 0.0
    %530 = vmatpush1.msra.mxu0 0.0
    %531 = vmatprep.subr.mxu0 0.0
    %532 = vmatpush1.msra.mxu0 0.0
    %533 = vmatprep.subr.mxu0 0.0
    %534 = vmatpush1.msra.mxu0 0.0
    %535 = vmatprep.subr.mxu0 0.0
    %536 = vmatpush1.msra.mxu0 0.0
    %537 = vmatprep.subr.mxu0 0.0
    %538 = vmatpush1.msra.mxu0 0.0
    %539 = vmatprep.subr.mxu0 0.0
    %540 = vmatpush1.msra.mxu0 0.0
    %541 = vmatprep.subr.mxu0 0.0
    %542 = vmatpush1.msra.mxu0 0.0
    %543 = vmatprep.subr.mxu0 0.0
    %544 = vmatpush1.msra.mxu0 0.0
    %545 = vmatprep.subr.mxu0 0.0
    %546 = vmatpush1.msra.mxu0 0.0
    %547 = vmatprep.subr.mxu0 0.0
    %548 = vmatpush1.msra.mxu0 0.0
    %549 = vmatprep.subr.mxu0 0.0
    %550 = vmatpush1.msra.mxu0 0.0
    %551 = vmatprep.subr.mxu0 0.0
    %552 = vmatpush1.msra.mxu0 0.0
    %553 = vmatprep.subr.mxu0 0.0
    %554 = vmatpush1.msra.mxu0 0.0
    %555 = vmatprep.subr.mxu0 0.0
    %556 = vmatpush1.msra.mxu0 0.0
    %557 = vmatprep.subr.mxu0 0.0
    %558 = vmatpush1.msra.mxu0 0.0
    %559 = vmatprep.subr.mxu0 0.0
    %560 = vmatpush1.msra.mxu0 0.0
    %561 = vmatprep.subr.mxu0 0.0
    %562 = vmatpush1.msra.mxu0 0.0
    %563 = vmatprep.subr.mxu0 0.0
    %564 = vmatpush1.msra.mxu0 0.0
    %565 = vmatprep.subr.mxu0 0.0
    %566 = vmatpush1.msra.mxu0 0.0
    %567 = vmatprep.subr.mxu0 0.0
    %568 = vmatpush1.msra.mxu0 0.0
    %569 = vmatprep.subr.mxu0 0.0
    %570 = vmatpush1.msra.mxu0 0.0
    %571 = vmatprep.subr.mxu0 0.0
    %572 = vmatpush1.msra.mxu0 0.0
    %573 = vmatprep.subr.mxu0 0.0
    %574 = vmatpush1.msra.mxu0 0.0
    %575 = vmatprep.mubr.f32.mxu0 0.0
    %576 = vmatmul.mubr.f32.gmra.mrb[0].mxu0 %v509
    %v577 = vpop.f32.mrb[0].mxu0
    %v578 = vadd.f32 0.0, %v577
    %v579 = vpop.f32.mrb[0].mxu0
    %580 = vdwg.mxu0
    %v581 = vsel %vm99, %v505, 0.0
    %582 = vadd.xlane.f32.xlu0 %v581
    %v583 = vpop.xlane.xlu0 %582
    %v584 = vsel %vm99, %v578, 0.0
    %585 = vadd.xlane.f32.xlu0 %v584
    %v586 = vpop.xlane.xlu0 %585
    %v587 = vrcp.pop 32.0
    %v588 = vmul.f32 %v583, %v587
    %v589 = vmul.f32 %v586, %v587
    %v590 = vsub.f32 %v505, %v588
    %v591 = vsub.f32 %v578, %v589
    %v592 = vmul.f32 %v590, %v590
    %v593 = vmul.f32 %v591, %v591
    %v594 = vsel %vm99, %v592, 0.0
    %595 = vadd.xlane.f32.xlu0 %v594
    %v596 = vpop.xlane.xlu0 %595
    %v597 = vsel %vm99, %v593, 0.0
    %598 = vadd.xlane.f32.xlu0 %v597
    %v599 = vpop.xlane.xlu0 %598
    %v600 = vmul.f32 %v596, %v587
    %v601 = vmul.f32 %v599, %v587
    %v602 = vadd.f32 %v600, 1e-05
    %v603 = vadd.f32 %v601, 1e-05
    %v604 = vrsqrt.pop %v602
    %v605 = vrsqrt.pop %v603
    %v606 = vmul.f32 %v590, %v604
    %v607 = vmul.f32 %v591, %v605
    %v608 = vld [vmem:[%s4] sm:$0x1]
    %v610 = vlaneseq
    %v611 = vshrl.u32 %v610, 7
    %v612 = vsub.s32 0, %v611
    %v613 = vrot.slane %v608, %v612
    %v615 = vmul.f32 %v606, %v613
    %v616 = vmul.f32 %v607, %v613
    %v617 = vld [vmem:[%s5] sm:$0x1]
    %v619 = vlaneseq
    %v620 = vshrl.u32 %v619, 7
    %v621 = vsub.s32 0, %v620
    %v622 = vrot.slane %v617, %v621
    %v624 = vadd.f32 %v615, %v622
    %v625 = vadd.f32 %v616, %v622
    %v626 = vmax.f32 %v624, 0.0
    %v627 = vmax.f32 %v625, 0.0
    %v628 = vadd.f32 %v626, 0.0
    %v629 = vadd.f32 %v627, 0.0
    %630 = vrot.lane.b32.xlu0 %v173, 96
    %v631 = vpop.permute.xlu0 %630
    %632 = vrot.lane.b32.xlu0 %v175, 96
    %v633 = vpop.permute.xlu0 %632
    %v634 = vsel %vm99, %v631, 0
    %v636 = vsel %vm99, %v633, 0
    %638 = vmatprep.subr.mxu0 0.0
    %639 = vmatpush1.xpose.msra.mxu0 %v636
    %640 = vmatprep.subr.mxu0 0.0
    %641 = vmatpush1.xpose.msra.mxu0 0.0
    %642 = vmatprep.subr.mxu0 0.0
    %643 = vmatpush1.xpose.msra.mxu0 0.0
    %644 = vmatprep.subr.mxu0 0.0
    %645 = vmatpush1.xpose.msra.mxu0 0.0
    %646 = vmatprep.subr.mxu0 0.0
    %647 = vmatpush1.xpose.msra.mxu0 0.0
    %648 = vmatprep.subr.mxu0 0.0
    %649 = vmatpush1.xpose.msra.mxu0 0.0
    %650 = vmatprep.subr.mxu0 0.0
    %651 = vmatpush1.xpose.msra.mxu0 0.0
    %652 = vmatprep.subr.mxu0 0.0
    %653 = vmatpush1.xpose.msra.mxu0 0.0
    %654 = vmatprep.subr.mxu0 0.0
    %655 = vmatpush1.xpose.msra.mxu0 0.0
    %656 = vmatprep.subr.mxu0 0.0
    %657 = vmatpush1.xpose.msra.mxu0 0.0
    %658 = vmatprep.subr.mxu0 0.0
    %659 = vmatpush1.xpose.msra.mxu0 0.0
    %660 = vmatprep.subr.mxu0 0.0
    %661 = vmatpush1.xpose.msra.mxu0 0.0
    %662 = vmatprep.subr.mxu0 0.0
    %663 = vmatpush1.xpose.msra.mxu0 0.0
    %664 = vmatprep.subr.mxu0 0.0
    %665 = vmatpush1.xpose.msra.mxu0 0.0
    %666 = vmatprep.subr.mxu0 0.0
    %667 = vmatpush1.xpose.msra.mxu0 0.0
    %668 = vmatprep.subr.mxu0 0.0
    %669 = vmatpush1.xpose.msra.mxu0 0.0
    %670 = vmatprep.subr.mxu0 0.0
    %671 = vmatpush1.xpose.msra.mxu0 0.0
    %672 = vmatprep.subr.mxu0 0.0
    %673 = vmatpush1.xpose.msra.mxu0 0.0
    %674 = vmatprep.subr.mxu0 0.0
    %675 = vmatpush1.xpose.msra.mxu0 0.0
    %676 = vmatprep.subr.mxu0 0.0
    %677 = vmatpush1.xpose.msra.mxu0 0.0
    %678 = vmatprep.subr.mxu0 0.0
    %679 = vmatpush1.xpose.msra.mxu0 0.0
    %680 = vmatprep.subr.mxu0 0.0
    %681 = vmatpush1.xpose.msra.mxu0 0.0
    %682 = vmatprep.subr.mxu0 0.0
    %683 = vmatpush1.xpose.msra.mxu0 0.0
    %684 = vmatprep.subr.mxu0 0.0
    %685 = vmatpush1.xpose.msra.mxu0 0.0
    %686 = vmatprep.subr.mxu0 0.0
    %687 = vmatpush1.xpose.msra.mxu0 0.0
    %688 = vmatprep.subr.mxu0 0.0
    %689 = vmatpush1.xpose.msra.mxu0 0.0
    %690 = vmatprep.subr.mxu0 0.0
    %691 = vmatpush1.xpose.msra.mxu0 0.0
    %692 = vmatprep.subr.mxu0 0.0
    %693 = vmatpush1.xpose.msra.mxu0 0.0
    %694 = vmatprep.subr.mxu0 0.0
    %695 = vmatpush1.xpose.msra.mxu0 0.0
    %696 = vmatprep.subr.mxu0 0.0
    %697 = vmatpush1.xpose.msra.mxu0 0.0
    %698 = vmatprep.subr.mxu0 0.0
    %699 = vmatpush1.xpose.msra.mxu0 0.0
    %700 = vmatprep.subr.mxu0 0.0
    %701 = vmatpush1.xpose.msra.mxu0 0.0
    %702 = vmatprep.mubr.f32.mxu0 0.0
    %703 = vmatmul.mubr.f32.gmra.mrb[0].mxu0 %v634
    %v704 = vpop.f32.mrb[0].mxu0
    %v705 = vadd.f32 %v258, %v704
    %v706 = vpop.f32.mrb[0].mxu0
    %707 = vdwg.mxu0
    %708 = vrot.lane.b32.xlu0 %v179, 96
    %v709 = vpop.permute.xlu0 %708
    %710 = vrot.lane.b32.xlu0 %v181, 96
    %v711 = vpop.permute.xlu0 %710
    %v712 = vsel %vm99, %v709, 0
    %v714 = vsel %vm99, %v711, 0
    %716 = vmatprep.subr.mxu0 0.0
    %717 = vmatpush1.xpose.msra.mxu0 %v714
    %718 = vmatprep.subr.mxu0 0.0
    %719 = vmatpush1.xpose.msra.mxu0 0.0
    %720 = vmatprep.subr.mxu0 0.0
    %721 = vmatpush1.xpose.msra.mxu0 0.0
    %722 = vmatprep.subr.mxu0 0.0
    %723 = vmatpush1.xpose.msra.mxu0 0.0
    %724 = vmatprep.subr.mxu0 0.0
    %725 = vmatpush1.xpose.msra.mxu0 0.0
    %726 = vmatprep.subr.mxu0 0.0
    %727 = vmatpush1.xpose.msra.mxu0 0.0
    %728 = vmatprep.subr.mxu0 0.0
    %729 = vmatpush1.xpose.msra.mxu0 0.0
    %730 = vmatprep.subr.mxu0 0.0
    %731 = vmatpush1.xpose.msra.mxu0 0.0
    %732 = vmatprep.subr.mxu0 0.0
    %733 = vmatpush1.xpose.msra.mxu0 0.0
    %734 = vmatprep.subr.mxu0 0.0
    %735 = vmatpush1.xpose.msra.mxu0 0.0
    %736 = vmatprep.subr.mxu0 0.0
    %737 = vmatpush1.xpose.msra.mxu0 0.0
    %738 = vmatprep.subr.mxu0 0.0
    %739 = vmatpush1.xpose.msra.mxu0 0.0
    %740 = vmatprep.subr.mxu0 0.0
    %741 = vmatpush1.xpose.msra.mxu0 0.0
    %742 = vmatprep.subr.mxu0 0.0
    %743 = vmatpush1.xpose.msra.mxu0 0.0
    %744 = vmatprep.subr.mxu0 0.0
    %745 = vmatpush1.xpose.msra.mxu0 0.0
    %746 = vmatprep.subr.mxu0 0.0
    %747 = vmatpush1.xpose.msra.mxu0 0.0
    %748 = vmatprep.subr.mxu0 0.0
    %749 = vmatpush1.xpose.msra.mxu0 0.0
    %750 = vmatprep.subr.mxu0 0.0
    %751 = vmatpush1.xpose.msra.mxu0 0.0
    %752 = vmatprep.subr.mxu0 0.0
    %753 = vmatpush1.xpose.msra.mxu0 0.0
    %754 = vmatprep.subr.mxu0 0.0
    %755 = vmatpush1.xpose.msra.mxu0 0.0
    %756 = vmatprep.subr.mxu0 0.0
    %757 = vmatpush1.xpose.msra.mxu0 0.0
    %758 = vmatprep.subr.mxu0 0.0
    %759 = vmatpush1.xpose.msra.mxu0 0.0
    %760 = vmatprep.subr.mxu0 0.0
    %761 = vmatpush1.xpose.msra.mxu0 0.0
    %762 = vmatprep.subr.mxu0 0.0
    %763 = vmatpush1.xpose.msra.mxu0 0.0
    %764 = vmatprep.subr.mxu0 0.0
    %765 = vmatpush1.xpose.msra.mxu0 0.0
    %766 = vmatprep.subr.mxu0 0.0
    %767 = vmatpush1.xpose.msra.mxu0 0.0
    %768 = vmatprep.subr.mxu0 0.0
    %769 = vmatpush1.xpose.msra.mxu0 0.0
    %770 = vmatprep.subr.mxu0 0.0
    %771 = vmatpush1.xpose.msra.mxu0 0.0
    %772 = vmatprep.subr.mxu0 0.0
    %773 = vmatpush1.xpose.msra.mxu0 0.0
    %774 = vmatprep.subr.mxu0 0.0
    %775 = vmatpush1.xpose.msra.mxu0 0.0
    %776 = vmatprep.subr.mxu0 0.0
    %777 = vmatpush1.xpose.msra.mxu0 0.0
    %778 = vmatprep.subr.mxu0 0.0
    %779 = vmatpush1.xpose.msra.mxu0 0.0
    %780 = vmatprep.mubr.f32.mxu0 0.0
    %781 = vmatmul.mubr.f32.gmra.mrb[0].mxu0 %v712
    %v782 = vpop.f32.mrb[0].mxu0
    %v783 = vadd.f32 %v259, %v782
    %v784 = vpop.f32.mrb[0].mxu0
    %785 = vdwg.mxu0
    %v786 = vsel %vm412, %v705, -inf
    %787 = vmax.xlane.f32.xlu0 %v786
    %v788 = vpop.xlane.xlu0 %787
    %v789 = vsel %vm412, %v783, -inf
    %790 = vmax.xlane.f32.xlu0 %v789
    %v791 = vpop.xlane.xlu0 %790
    %v792 = vsub.f32 %v705, %v788
    %v793 = vsub.f32 %v783, %v791
    %v794 = vmul.f32 %v792, 1.442695
    %v795 = vpow.pop %v794
    %v796 = vmul.f32 %v793, 1.442695
    %v797 = vpow.pop %v796
    %v798 = vsel %vm412, %v795, 0.0
    %799 = vadd.xlane.f32.xlu0 %v798
    %v800 = vpop.xlane.xlu0 %799
    %v801 = vsel %vm412, %v797, 0.0
    %802 = vadd.xlane.f32.xlu0 %v801
    %v803 = vpop.xlane.xlu0 %802
    %v804 = vrcp.pop %v800
    %v805 = vrcp.pop %v803
    %v806 = vmul.f32 %v795, %v804
    %v807 = vmul.f32 %v797, %v805
    %809 = vrot.lane.b32.xlu0 %v250, 96
    %v810 = vpop.permute.xlu0 %809
    %v813 = vsel %vm412, %v806, 0
    %815 = vmatprep.subr.mxu0 0.0
    %816 = vmatpush1.msra.mxu0 %v810
    %817 = vmatprep.subr.mxu0 0.0
    %818 = vmatpush1.msra.mxu0 0.0
    %819 = vmatprep.subr.mxu0 0.0
    %820 = vmatpush1.msra.mxu0 0.0
    %821 = vmatprep.subr.mxu0 0.0
    %822 = vmatpush1.msra.mxu0 0.0
    %823 = vmatprep.subr.mxu0 0.0
    %824 = vmatpush1.msra.mxu0 0.0
    %825 = vmatprep.subr.mxu0 0.0
    %826 = vmatpush1.msra.mxu0 0.0
    %827 = vmatprep.subr.mxu0 0.0
    %828 = vmatpush1.msra.mxu0 0.0
    %829 = vmatprep.subr.mxu0 0.0
    %830 = vmatpush1.msra.mxu0 0.0
    %831 = vmatprep.subr.mxu0 0.0
    %832 = vmatpush1.msra.mxu0 0.0
    %833 = vmatprep.subr.mxu0 0.0
    %834 = vmatpush1.msra.mxu0 0.0
    %835 = vmatprep.subr.mxu0 0.0
    %836 = vmatpush1.msra.mxu0 0.0
    %837 = vmatprep.subr.mxu0 0.0
    %838 = vmatpush1.msra.mxu0 0.0
    %839 = vmatprep.subr.mxu0 0.0
    %840 = vmatpush1.msra.mxu0 0.0
    %841 = vmatprep.subr.mxu0 0.0
    %842 = vmatpush1.msra.mxu0 0.0
    %843 = vmatprep.subr.mxu0 0.0
    %844 = vmatpush1.msra.mxu0 0.0
    %845 = vmatprep.subr.mxu0 0.0
    %846 = vmatpush1.msra.mxu0 0.0
    %847 = vmatprep.subr.mxu0 0.0
    %848 = vmatpush1.msra.mxu0 0.0
    %849 = vmatprep.subr.mxu0 0.0
    %850 = vmatpush1.msra.mxu0 0.0
    %851 = vmatprep.subr.mxu0 0.0
    %852 = vmatpush1.msra.mxu0 0.0
    %853 = vmatprep.subr.mxu0 0.0
    %854 = vmatpush1.msra.mxu0 0.0
    %855 = vmatprep.subr.mxu0 0.0
    %856 = vmatpush1.msra.mxu0 0.0
    %857 = vmatprep.subr.mxu0 0.0
    %858 = vmatpush1.msra.mxu0 0.0
    %859 = vmatprep.subr.mxu0 0.0
    %860 = vmatpush1.msra.mxu0 0.0
    %861 = vmatprep.subr.mxu0 0.0
    %862 = vmatpush1.msra.mxu0 0.0
    %863 = vmatprep.subr.mxu0 0.0
    %864 = vmatpush1.msra.mxu0 0.0
    %865 = vmatprep.subr.mxu0 0.0
    %866 = vmatpush1.msra.mxu0 0.0
    %867 = vmatprep.subr.mxu0 0.0
    %868 = vmatpush1.msra.mxu0 0.0
    %869 = vmatprep.subr.mxu0 0.0
    %870 = vmatpush1.msra.mxu0 0.0
    %871 = vmatprep.subr.mxu0 0.0
    %872 = vmatpush1.msra.mxu0 0.0
    %873 = vmatprep.subr.mxu0 0.0
    %874 = vmatpush1.msra.mxu0 0.0
    %875 = vmatprep.subr.mxu0 0.0
    %876 = vmatpush1.msra.mxu0 0.0
    %877 = vmatprep.subr.mxu0 0.0
    %878 = vmatpush1.msra.mxu0 0.0
    %879 = vmatprep.mubr.f32.mxu0 0.0
    %880 = vmatmul.mubr.f32.gmra.mrb[0].mxu0 %v813
    %v881 = vpop.f32.mrb[0].mxu0
    %v882 = vadd.f32 0.0, %v881
    %v883 = vpop.f32.mrb[0].mxu0
    %884 = vdwg.mxu0
    %886 = vrot.lane.b32.xlu0 %v255, 96
    %v887 = vpop.permute.xlu0 %886
    %v890 = vsel %vm412, %v807, 0
    %892 = vmatprep.subr.mxu0 0.0
    %893 = vmatpush1.msra.mxu0 %v887
    %894 = vmatprep.subr.mxu0 0.0
    %895 = vmatpush1.msra.mxu0 0.0
    %896 = vmatprep.subr.mxu0 0.0
    %897 = vmatpush1.msra.mxu0 0.0
    %898 = vmatprep.subr.mxu0 0.0
    %899 = vmatpush1.msra.mxu0 0.0
    %900 = vmatprep.subr.mxu0 0.0
    %901 = vmatpush1.msra.mxu0 0.0
    %902 = vmatprep.subr.mxu0 0.0
    %903 = vmatpush1.msra.mxu0 0.0
    %904 = vmatprep.subr.mxu0 0.0
    %905 = vmatpush1.msra.mxu0 0.0
    %906 = vmatprep.subr.mxu0 0.0
    %907 = vmatpush1.msra.mxu0 0.0
    %908 = vmatprep.subr.mxu0 0.0
    %909 = vmatpush1.msra.mxu0 0.0
    %910 = vmatprep.subr.mxu0 0.0
    %911 = vmatpush1.msra.mxu0 0.0
    %912 = vmatprep.subr.mxu0 0.0
    %913 = vmatpush1.msra.mxu0 0.0
    %914 = vmatprep.subr.mxu0 0.0
    %915 = vmatpush1.msra.mxu0 0.0
    %916 = vmatprep.subr.mxu0 0.0
    %917 = vmatpush1.msra.mxu0 0.0
    %918 = vmatprep.subr.mxu0 0.0
    %919 = vmatpush1.msra.mxu0 0.0
    %920 = vmatprep.subr.mxu0 0.0
    %921 = vmatpush1.msra.mxu0 0.0
    %922 = vmatprep.subr.mxu0 0.0
    %923 = vmatpush1.msra.mxu0 0.0
    %924 = vmatprep.subr.mxu0 0.0
    %925 = vmatpush1.msra.mxu0 0.0
    %926 = vmatprep.subr.mxu0 0.0
    %927 = vmatpush1.msra.mxu0 0.0
    %928 = vmatprep.subr.mxu0 0.0
    %929 = vmatpush1.msra.mxu0 0.0
    %930 = vmatprep.subr.mxu0 0.0
    %931 = vmatpush1.msra.mxu0 0.0
    %932 = vmatprep.subr.mxu0 0.0
    %933 = vmatpush1.msra.mxu0 0.0
    %934 = vmatprep.subr.mxu0 0.0
    %935 = vmatpush1.msra.mxu0 0.0
    %936 = vmatprep.subr.mxu0 0.0
    %937 = vmatpush1.msra.mxu0 0.0
    %938 = vmatprep.subr.mxu0 0.0
    %939 = vmatpush1.msra.mxu0 0.0
    %940 = vmatprep.subr.mxu0 0.0
    %941 = vmatpush1.msra.mxu0 0.0
    %942 = vmatprep.subr.mxu0 0.0
    %943 = vmatpush1.msra.mxu0 0.0
    %944 = vmatprep.subr.mxu0 0.0
    %945 = vmatpush1.msra.mxu0 0.0
    %946 = vmatprep.subr.mxu0 0.0
    %947 = vmatpush1.msra.mxu0 0.0
    %948 = vmatprep.subr.mxu0 0.0
    %949 = vmatpush1.msra.mxu0 0.0
    %950 = vmatprep.subr.mxu0 0.0
    %951 = vmatpush1.msra.mxu0 0.0
    %952 = vmatprep.subr.mxu0 0.0
    %953 = vmatpush1.msra.mxu0 0.0
    %954 = vmatprep.subr.mxu0 0.0
    %955 = vmatpush1.msra.mxu0 0.0
    %956 = vmatprep.mubr.f32.mxu0 0.0
    %957 = vmatmul.mubr.f32.gmra.mrb[0].mxu0 %v890
    %v958 = vpop.f32.mrb[0].mxu0
    %v959 = vadd.f32 0.0, %v958
    %v960 = vpop.f32.mrb[0].mxu0
    %961 = vdwg.mxu0
    %v962 = vsel %vm99, %v882, 0.0
    %963 = vadd.xlane.f32.xlu0 %v962
    %v964 = vpop.xlane.xlu0 %963
    %v965 = vsel %vm99, %v959, 0.0
    %966 = vadd.xlane.f32.xlu0 %v965
    %v967 = vpop.xlane.xlu0 %966
    %v968 = vmul.f32 %v964, %v587
    %v969 = vmul.f32 %v967, %v587
    %v970 = vsub.f32 %v882, %v968
    %v971 = vsub.f32 %v959, %v969
    %v972 = vmul.f32 %v970, %v970
    %v973 = vmul.f32 %v971, %v971
    %v974 = vsel %vm99, %v972, 0.0
    %975 = vadd.xlane.f32.xlu0 %v974
    %v976 = vpop.xlane.xlu0 %975
    %v977 = vsel %vm99, %v973, 0.0
    %978 = vadd.xlane.f32.xlu0 %v977
    %v979 = vpop.xlane.xlu0 %978
    %v980 = vmul.f32 %v976, %v587
    %v981 = vmul.f32 %v979, %v587
    %v982 = vadd.f32 %v980, 1e-05
    %v983 = vadd.f32 %v981, 1e-05
    %v984 = vrsqrt.pop %v982
    %v985 = vrsqrt.pop %v983
    %v986 = vmul.f32 %v970, %v984
    %v987 = vmul.f32 %v971, %v985
    %s988 = scalar_lea.vmem %s4, 1
    %v989 = vld [vmem:[%s988] sm:$0x1]
    %v991 = vlaneseq
    %v992 = vshrl.u32 %v991, 7
    %v993 = vsub.s32 0, %v992
    %v994 = vrot.slane %v989, %v993
    %v996 = vmul.f32 %v986, %v994
    %v997 = vmul.f32 %v987, %v994
    %s998 = scalar_lea.vmem %s5, 1
    %v999 = vld [vmem:[%s998] sm:$0x1]
    %v1001 = vlaneseq
    %v1002 = vshrl.u32 %v1001, 7
    %v1003 = vsub.s32 0, %v1002
    %v1004 = vrot.slane %v999, %v1003
    %v1006 = vadd.f32 %v996, %v1004
    %v1007 = vadd.f32 %v997, %v1004
    %v1008 = vmax.f32 %v1006, 0.0
    %v1009 = vmax.f32 %v1007, 0.0
    %v1010 = vadd.f32 %v628, %v1008
    %v1011 = vadd.f32 %v629, %v1009
    %1012 = vrot.lane.b32.xlu0 %v173, 64
    %v1013 = vpop.permute.xlu0 %1012
    %1014 = vrot.lane.b32.xlu0 %v175, 64
    %v1015 = vpop.permute.xlu0 %1014
    %v1016 = vsel %vm99, %v1013, 0
    %v1018 = vsel %vm99, %v1015, 0
    %1020 = vmatprep.subr.mxu0 0.0
    %1021 = vmatpush1.xpose.msra.mxu0 %v1018
    %1022 = vmatprep.subr.mxu0 0.0
    %1023 = vmatpush1.xpose.msra.mxu0 0.0
    %1024 = vmatprep.subr.mxu0 0.0
    %1025 = vmatpush1.xpose.msra.mxu0 0.0
    %1026 = vmatprep.subr.mxu0 0.0
    %1027 = vmatpush1.xpose.msra.mxu0 0.0
    %1028 = vmatprep.subr.mxu0 0.0
    %1029 = vmatpush1.xpose.msra.mxu0 0.0
    %1030 = vmatprep.subr.mxu0 0.0
    %1031 = vmatpush1.xpose.msra.mxu0 0.0
    %1032 = vmatprep.subr.mxu0 0.0
    %1033 = vmatpush1.xpose.msra.mxu0 0.0
    %1034 = vmatprep.subr.mxu0 0.0
    %1035 = vmatpush1.xpose.msra.mxu0 0.0
    %1036 = vmatprep.subr.mxu0 0.0
    %1037 = vmatpush1.xpose.msra.mxu0 0.0
    %1038 = vmatprep.subr.mxu0 0.0
    %1039 = vmatpush1.xpose.msra.mxu0 0.0
    %1040 = vmatprep.subr.mxu0 0.0
    %1041 = vmatpush1.xpose.msra.mxu0 0.0
    %1042 = vmatprep.subr.mxu0 0.0
    %1043 = vmatpush1.xpose.msra.mxu0 0.0
    %1044 = vmatprep.subr.mxu0 0.0
    %1045 = vmatpush1.xpose.msra.mxu0 0.0
    %1046 = vmatprep.subr.mxu0 0.0
    %1047 = vmatpush1.xpose.msra.mxu0 0.0
    %1048 = vmatprep.subr.mxu0 0.0
    %1049 = vmatpush1.xpose.msra.mxu0 0.0
    %1050 = vmatprep.subr.mxu0 0.0
    %1051 = vmatpush1.xpose.msra.mxu0 0.0
    %1052 = vmatprep.subr.mxu0 0.0
    %1053 = vmatpush1.xpose.msra.mxu0 0.0
    %1054 = vmatprep.subr.mxu0 0.0
    %1055 = vmatpush1.xpose.msra.mxu0 0.0
    %1056 = vmatprep.subr.mxu0 0.0
    %1057 = vmatpush1.xpose.msra.mxu0 0.0
    %1058 = vmatprep.subr.mxu0 0.0
    %1059 = vmatpush1.xpose.msra.mxu0 0.0
    %1060 = vmatprep.subr.mxu0 0.0
    %1061 = vmatpush1.xpose.msra.mxu0 0.0
    %1062 = vmatprep.subr.mxu0 0.0
    %1063 = vmatpush1.xpose.msra.mxu0 0.0
    %1064 = vmatprep.subr.mxu0 0.0
    %1065 = vmatpush1.xpose.msra.mxu0 0.0
    %1066 = vmatprep.subr.mxu0 0.0
    %1067 = vmatpush1.xpose.msra.mxu0 0.0
    %1068 = vmatprep.subr.mxu0 0.0
    %1069 = vmatpush1.xpose.msra.mxu0 0.0
    %1070 = vmatprep.subr.mxu0 0.0
    %1071 = vmatpush1.xpose.msra.mxu0 0.0
    %1072 = vmatprep.subr.mxu0 0.0
    %1073 = vmatpush1.xpose.msra.mxu0 0.0
    %1074 = vmatprep.subr.mxu0 0.0
    %1075 = vmatpush1.xpose.msra.mxu0 0.0
    %1076 = vmatprep.subr.mxu0 0.0
    %1077 = vmatpush1.xpose.msra.mxu0 0.0
    %1078 = vmatprep.subr.mxu0 0.0
    %1079 = vmatpush1.xpose.msra.mxu0 0.0
    %1080 = vmatprep.subr.mxu0 0.0
    %1081 = vmatpush1.xpose.msra.mxu0 0.0
    %1082 = vmatprep.subr.mxu0 0.0
    %1083 = vmatpush1.xpose.msra.mxu0 0.0
    %1084 = vmatprep.mubr.f32.mxu0 0.0
    %1085 = vmatmul.mubr.f32.gmra.mrb[0].mxu0 %v1016
    %v1086 = vpop.f32.mrb[0].mxu0
    %v1087 = vadd.f32 %v258, %v1086
    %v1088 = vpop.f32.mrb[0].mxu0
    %1089 = vdwg.mxu0
    %1090 = vrot.lane.b32.xlu0 %v179, 64
    %v1091 = vpop.permute.xlu0 %1090
    %1092 = vrot.lane.b32.xlu0 %v181, 64
    %v1093 = vpop.permute.xlu0 %1092
    %v1094 = vsel %vm99, %v1091, 0
    %v1096 = vsel %vm99, %v1093, 0
    %1098 = vmatprep.subr.mxu0 0.0
    %1099 = vmatpush1.xpose.msra.mxu0 %v1096
    %1100 = vmatprep.subr.mxu0 0.0
    %1101 = vmatpush1.xpose.msra.mxu0 0.0
    %1102 = vmatprep.subr.mxu0 0.0
    %1103 = vmatpush1.xpose.msra.mxu0 0.0
    %1104 = vmatprep.subr.mxu0 0.0
    %1105 = vmatpush1.xpose.msra.mxu0 0.0
    %1106 = vmatprep.subr.mxu0 0.0
    %1107 = vmatpush1.xpose.msra.mxu0 0.0
    %1108 = vmatprep.subr.mxu0 0.0
    %1109 = vmatpush1.xpose.msra.mxu0 0.0
    %1110 = vmatprep.subr.mxu0 0.0
    %1111 = vmatpush1.xpose.msra.mxu0 0.0
    %1112 = vmatprep.subr.mxu0 0.0
    %1113 = vmatpush1.xpose.msra.mxu0 0.0
    %1114 = vmatprep.subr.mxu0 0.0
    %1115 = vmatpush1.xpose.msra.mxu0 0.0
    %1116 = vmatprep.subr.mxu0 0.0
    %1117 = vmatpush1.xpose.msra.mxu0 0.0
    %1118 = vmatprep.subr.mxu0 0.0
    %1119 = vmatpush1.xpose.msra.mxu0 0.0
    %1120 = vmatprep.subr.mxu0 0.0
    %1121 = vmatpush1.xpose.msra.mxu0 0.0
    %1122 = vmatprep.subr.mxu0 0.0
    %1123 = vmatpush1.xpose.msra.mxu0 0.0
    %1124 = vmatprep.subr.mxu0 0.0
    %1125 = vmatpush1.xpose.msra.mxu0 0.0
    %1126 = vmatprep.subr.mxu0 0.0
    %1127 = vmatpush1.xpose.msra.mxu0 0.0
    %1128 = vmatprep.subr.mxu0 0.0
    %1129 = vmatpush1.xpose.msra.mxu0 0.0
    %1130 = vmatprep.subr.mxu0 0.0
    %1131 = vmatpush1.xpose.msra.mxu0 0.0
    %1132 = vmatprep.subr.mxu0 0.0
    %1133 = vmatpush1.xpose.msra.mxu0 0.0
    %1134 = vmatprep.subr.mxu0 0.0
    %1135 = vmatpush1.xpose.msra.mxu0 0.0
    %1136 = vmatprep.subr.mxu0 0.0
    %1137 = vmatpush1.xpose.msra.mxu0 0.0
    %1138 = vmatprep.subr.mxu0 0.0
    %1139 = vmatpush1.xpose.msra.mxu0 0.0
    %1140 = vmatprep.subr.mxu0 0.0
    %1141 = vmatpush1.xpose.msra.mxu0 0.0
    %1142 = vmatprep.subr.mxu0 0.0
    %1143 = vmatpush1.xpose.msra.mxu0 0.0
    %1144 = vmatprep.subr.mxu0 0.0
    %1145 = vmatpush1.xpose.msra.mxu0 0.0
    %1146 = vmatprep.subr.mxu0 0.0
    %1147 = vmatpush1.xpose.msra.mxu0 0.0
    %1148 = vmatprep.subr.mxu0 0.0
    %1149 = vmatpush1.xpose.msra.mxu0 0.0
    %1150 = vmatprep.subr.mxu0 0.0
    %1151 = vmatpush1.xpose.msra.mxu0 0.0
    %1152 = vmatprep.subr.mxu0 0.0
    %1153 = vmatpush1.xpose.msra.mxu0 0.0
    %1154 = vmatprep.subr.mxu0 0.0
    %1155 = vmatpush1.xpose.msra.mxu0 0.0
    %1156 = vmatprep.subr.mxu0 0.0
    %1157 = vmatpush1.xpose.msra.mxu0 0.0
    %1158 = vmatprep.subr.mxu0 0.0
    %1159 = vmatpush1.xpose.msra.mxu0 0.0
    %1160 = vmatprep.subr.mxu0 0.0
    %1161 = vmatpush1.xpose.msra.mxu0 0.0
    %1162 = vmatprep.mubr.f32.mxu0 0.0
    %1163 = vmatmul.mubr.f32.gmra.mrb[0].mxu0 %v1094
    %v1164 = vpop.f32.mrb[0].mxu0
    %v1165 = vadd.f32 %v259, %v1164
    %v1166 = vpop.f32.mrb[0].mxu0
    %1167 = vdwg.mxu0
    %v1168 = vsel %vm412, %v1087, -inf
    %1169 = vmax.xlane.f32.xlu0 %v1168
    %v1170 = vpop.xlane.xlu0 %1169
    %v1171 = vsel %vm412, %v1165, -inf
    %1172 = vmax.xlane.f32.xlu0 %v1171
    %v1173 = vpop.xlane.xlu0 %1172
    %v1174 = vsub.f32 %v1087, %v1170
    %v1175 = vsub.f32 %v1165, %v1173
    %v1176 = vmul.f32 %v1174, 1.442695
    %v1177 = vpow.pop %v1176
    %v1178 = vmul.f32 %v1175, 1.442695
    %v1179 = vpow.pop %v1178
    %v1180 = vsel %vm412, %v1177, 0.0
    %1181 = vadd.xlane.f32.xlu0 %v1180
    %v1182 = vpop.xlane.xlu0 %1181
    %v1183 = vsel %vm412, %v1179, 0.0
    %1184 = vadd.xlane.f32.xlu0 %v1183
    %v1185 = vpop.xlane.xlu0 %1184
    %v1186 = vrcp.pop %v1182
    %v1187 = vrcp.pop %v1185
    %v1188 = vmul.f32 %v1177, %v1186
    %v1189 = vmul.f32 %v1179, %v1187
    %1190 = vrot.lane.b32.xlu0 %v250, 64
    %v1191 = vpop.permute.xlu0 %1190
    %v1194 = vsel %vm412, %v1188, 0
    %1196 = vmatprep.subr.mxu0 0.0
    %1197 = vmatpush1.msra.mxu0 %v1191
    %1198 = vmatprep.subr.mxu0 0.0
    %1199 = vmatpush1.msra.mxu0 0.0
    %1200 = vmatprep.subr.mxu0 0.0
    %1201 = vmatpush1.msra.mxu0 0.0
    %1202 = vmatprep.subr.mxu0 0.0
    %1203 = vmatpush1.msra.mxu0 0.0
    %1204 = vmatprep.subr.mxu0 0.0
    %1205 = vmatpush1.msra.mxu0 0.0
    %1206 = vmatprep.subr.mxu0 0.0
    %1207 = vmatpush1.msra.mxu0 0.0
    %1208 = vmatprep.subr.mxu0 0.0
    %1209 = vmatpush1.msra.mxu0 0.0
    %1210 = vmatprep.subr.mxu0 0.0
    %1211 = vmatpush1.msra.mxu0 0.0
    %1212 = vmatprep.subr.mxu0 0.0
    %1213 = vmatpush1.msra.mxu0 0.0
    %1214 = vmatprep.subr.mxu0 0.0
    %1215 = vmatpush1.msra.mxu0 0.0
    %1216 = vmatprep.subr.mxu0 0.0
    %1217 = vmatpush1.msra.mxu0 0.0
    %1218 = vmatprep.subr.mxu0 0.0
    %1219 = vmatpush1.msra.mxu0 0.0
    %1220 = vmatprep.subr.mxu0 0.0
    %1221 = vmatpush1.msra.mxu0 0.0
    %1222 = vmatprep.subr.mxu0 0.0
    %1223 = vmatpush1.msra.mxu0 0.0
    %1224 = vmatprep.subr.mxu0 0.0
    %1225 = vmatpush1.msra.mxu0 0.0
    %1226 = vmatprep.subr.mxu0 0.0
    %1227 = vmatpush1.msra.mxu0 0.0
    %1228 = vmatprep.subr.mxu0 0.0
    %1229 = vmatpush1.msra.mxu0 0.0
    %1230 = vmatprep.subr.mxu0 0.0
    %1231 = vmatpush1.msra.mxu0 0.0
    %1232 = vmatprep.subr.mxu0 0.0
    %1233 = vmatpush1.msra.mxu0 0.0
    %1234 = vmatprep.subr.mxu0 0.0
    %1235 = vmatpush1.msra.mxu0 0.0
    %1236 = vmatprep.subr.mxu0 0.0
    %1237 = vmatpush1.msra.mxu0 0.0
    %1238 = vmatprep.subr.mxu0 0.0
    %1239 = vmatpush1.msra.mxu0 0.0
    %1240 = vmatprep.subr.mxu0 0.0
    %1241 = vmatpush1.msra.mxu0 0.0
    %1242 = vmatprep.subr.mxu0 0.0
    %1243 = vmatpush1.msra.mxu0 0.0
    %1244 = vmatprep.subr.mxu0 0.0
    %1245 = vmatpush1.msra.mxu0 0.0
    %1246 = vmatprep.subr.mxu0 0.0
    %1247 = vmatpush1.msra.mxu0 0.0
    %1248 = vmatprep.subr.mxu0 0.0
    %1249 = vmatpush1.msra.mxu0 0.0
    %1250 = vmatprep.subr.mxu0 0.0
    %1251 = vmatpush1.msra.mxu0 0.0
    %1252 = vmatprep.subr.mxu0 0.0
    %1253 = vmatpush1.msra.mxu0 0.0
    %1254 = vmatprep.subr.mxu0 0.0
    %1255 = vmatpush1.msra.mxu0 0.0
    %1256 = vmatprep.subr.mxu0 0.0
    %1257 = vmatpush1.msra.mxu0 0.0
    %1258 = vmatprep.subr.mxu0 0.0
    %1259 = vmatpush1.msra.mxu0 0.0
    %1260 = vmatprep.mubr.f32.mxu0 0.0
    %1261 = vmatmul.mubr.f32.gmra.mrb[0].mxu0 %v1194
    %v1262 = vpop.f32.mrb[0].mxu0
    %v1263 = vadd.f32 0.0, %v1262
    %v1264 = vpop.f32.mrb[0].mxu0
    %1265 = vdwg.mxu0
    %1266 = vrot.lane.b32.xlu0 %v255, 64
    %v1267 = vpop.permute.xlu0 %1266
    %v1270 = vsel %vm412, %v1189, 0
    %1272 = vmatprep.subr.mxu0 0.0
    %1273 = vmatpush1.msra.mxu0 %v1267
    %1274 = vmatprep.subr.mxu0 0.0
    %1275 = vmatpush1.msra.mxu0 0.0
    %1276 = vmatprep.subr.mxu0 0.0
    %1277 = vmatpush1.msra.mxu0 0.0
    %1278 = vmatprep.subr.mxu0 0.0
    %1279 = vmatpush1.msra.mxu0 0.0
    %1280 = vmatprep.subr.mxu0 0.0
    %1281 = vmatpush1.msra.mxu0 0.0
    %1282 = vmatprep.subr.mxu0 0.0
    %1283 = vmatpush1.msra.mxu0 0.0
    %1284 = vmatprep.subr.mxu0 0.0
    %1285 = vmatpush1.msra.mxu0 0.0
    %1286 = vmatprep.subr.mxu0 0.0
    %1287 = vmatpush1.msra.mxu0 0.0
    %1288 = vmatprep.subr.mxu0 0.0
    %1289 = vmatpush1.msra.mxu0 0.0
    %1290 = vmatprep.subr.mxu0 0.0
    %1291 = vmatpush1.msra.mxu0 0.0
    %1292 = vmatprep.subr.mxu0 0.0
    %1293 = vmatpush1.msra.mxu0 0.0
    %1294 = vmatprep.subr.mxu0 0.0
    %1295 = vmatpush1.msra.mxu0 0.0
    %1296 = vmatprep.subr.mxu0 0.0
    %1297 = vmatpush1.msra.mxu0 0.0
    %1298 = vmatprep.subr.mxu0 0.0
    %1299 = vmatpush1.msra.mxu0 0.0
    %1300 = vmatprep.subr.mxu0 0.0
    %1301 = vmatpush1.msra.mxu0 0.0
    %1302 = vmatprep.subr.mxu0 0.0
    %1303 = vmatpush1.msra.mxu0 0.0
    %1304 = vmatprep.subr.mxu0 0.0
    %1305 = vmatpush1.msra.mxu0 0.0
    %1306 = vmatprep.subr.mxu0 0.0
    %1307 = vmatpush1.msra.mxu0 0.0
    %1308 = vmatprep.subr.mxu0 0.0
    %1309 = vmatpush1.msra.mxu0 0.0
    %1310 = vmatprep.subr.mxu0 0.0
    %1311 = vmatpush1.msra.mxu0 0.0
    %1312 = vmatprep.subr.mxu0 0.0
    %1313 = vmatpush1.msra.mxu0 0.0
    %1314 = vmatprep.subr.mxu0 0.0
    %1315 = vmatpush1.msra.mxu0 0.0
    %1316 = vmatprep.subr.mxu0 0.0
    %1317 = vmatpush1.msra.mxu0 0.0
    %1318 = vmatprep.subr.mxu0 0.0
    %1319 = vmatpush1.msra.mxu0 0.0
    %1320 = vmatprep.subr.mxu0 0.0
    %1321 = vmatpush1.msra.mxu0 0.0
    %1322 = vmatprep.subr.mxu0 0.0
    %1323 = vmatpush1.msra.mxu0 0.0
    %1324 = vmatprep.subr.mxu0 0.0
    %1325 = vmatpush1.msra.mxu0 0.0
    %1326 = vmatprep.subr.mxu0 0.0
    %1327 = vmatpush1.msra.mxu0 0.0
    %1328 = vmatprep.subr.mxu0 0.0
    %1329 = vmatpush1.msra.mxu0 0.0
    %1330 = vmatprep.subr.mxu0 0.0
    %1331 = vmatpush1.msra.mxu0 0.0
    %1332 = vmatprep.subr.mxu0 0.0
    %1333 = vmatpush1.msra.mxu0 0.0
    %1334 = vmatprep.subr.mxu0 0.0
    %1335 = vmatpush1.msra.mxu0 0.0
    %1336 = vmatprep.mubr.f32.mxu0 0.0
    %1337 = vmatmul.mubr.f32.gmra.mrb[0].mxu0 %v1270
    %v1338 = vpop.f32.mrb[0].mxu0
    %v1339 = vadd.f32 0.0, %v1338
    %v1340 = vpop.f32.mrb[0].mxu0
    %1341 = vdwg.mxu0
    %v1342 = vsel %vm99, %v1263, 0.0
    %1343 = vadd.xlane.f32.xlu0 %v1342
    %v1344 = vpop.xlane.xlu0 %1343
    %v1345 = vsel %vm99, %v1339, 0.0
    %1346 = vadd.xlane.f32.xlu0 %v1345
    %v1347 = vpop.xlane.xlu0 %1346
    %v1348 = vmul.f32 %v1344, %v587
    %v1349 = vmul.f32 %v1347, %v587
    %v1350 = vsub.f32 %v1263, %v1348
    %v1351 = vsub.f32 %v1339, %v1349
    %v1352 = vmul.f32 %v1350, %v1350
    %v1353 = vmul.f32 %v1351, %v1351
    %v1354 = vsel %vm99, %v1352, 0.0
    %1355 = vadd.xlane.f32.xlu0 %v1354
    %v1356 = vpop.xlane.xlu0 %1355
    %v1357 = vsel %vm99, %v1353, 0.0
    %1358 = vadd.xlane.f32.xlu0 %v1357
    %v1359 = vpop.xlane.xlu0 %1358
    %v1360 = vmul.f32 %v1356, %v587
    %v1361 = vmul.f32 %v1359, %v587
    %v1362 = vadd.f32 %v1360, 1e-05
    %v1363 = vadd.f32 %v1361, 1e-05
    %v1364 = vrsqrt.pop %v1362
    %v1365 = vrsqrt.pop %v1363
    %v1366 = vmul.f32 %v1350, %v1364
    %v1367 = vmul.f32 %v1351, %v1365
    %s1368 = scalar_lea.vmem %s4, 2
    %v1369 = vld [vmem:[%s1368] sm:$0x1]
    %v1371 = vlaneseq
    %v1372 = vshrl.u32 %v1371, 7
    %v1373 = vsub.s32 0, %v1372
    %v1374 = vrot.slane %v1369, %v1373
    %v1376 = vmul.f32 %v1366, %v1374
    %v1377 = vmul.f32 %v1367, %v1374
    %s1378 = scalar_lea.vmem %s5, 2
    %v1379 = vld [vmem:[%s1378] sm:$0x1]
    %v1381 = vlaneseq
    %v1382 = vshrl.u32 %v1381, 7
    %v1383 = vsub.s32 0, %v1382
    %v1384 = vrot.slane %v1379, %v1383
    %v1386 = vadd.f32 %v1376, %v1384
    %v1387 = vadd.f32 %v1377, %v1384
    %v1388 = vmax.f32 %v1386, 0.0
    %v1389 = vmax.f32 %v1387, 0.0
    %v1390 = vadd.f32 %v1010, %v1388
    %v1391 = vadd.f32 %v1011, %v1389
    %1392 = vrot.lane.b32.xlu0 %v173, 32
    %v1393 = vpop.permute.xlu0 %1392
    %1394 = vrot.lane.b32.xlu0 %v175, 32
    %v1395 = vpop.permute.xlu0 %1394
    %v1396 = vsel %vm99, %v1393, 0
    %v1398 = vsel %vm99, %v1395, 0
    %1400 = vmatprep.subr.mxu0 0.0
    %1401 = vmatpush1.xpose.msra.mxu0 %v1398
    %1402 = vmatprep.subr.mxu0 0.0
    %1403 = vmatpush1.xpose.msra.mxu0 0.0
    %1404 = vmatprep.subr.mxu0 0.0
    %1405 = vmatpush1.xpose.msra.mxu0 0.0
    %1406 = vmatprep.subr.mxu0 0.0
    %1407 = vmatpush1.xpose.msra.mxu0 0.0
    %1408 = vmatprep.subr.mxu0 0.0
    %1409 = vmatpush1.xpose.msra.mxu0 0.0
    %1410 = vmatprep.subr.mxu0 0.0
    %1411 = vmatpush1.xpose.msra.mxu0 0.0
    %1412 = vmatprep.subr.mxu0 0.0
    %1413 = vmatpush1.xpose.msra.mxu0 0.0
    %1414 = vmatprep.subr.mxu0 0.0
    %1415 = vmatpush1.xpose.msra.mxu0 0.0
    %1416 = vmatprep.subr.mxu0 0.0
    %1417 = vmatpush1.xpose.msra.mxu0 0.0
    %1418 = vmatprep.subr.mxu0 0.0
    %1419 = vmatpush1.xpose.msra.mxu0 0.0
    %1420 = vmatprep.subr.mxu0 0.0
    %1421 = vmatpush1.xpose.msra.mxu0 0.0
    %1422 = vmatprep.subr.mxu0 0.0
    %1423 = vmatpush1.xpose.msra.mxu0 0.0
    %1424 = vmatprep.subr.mxu0 0.0
    %1425 = vmatpush1.xpose.msra.mxu0 0.0
    %1426 = vmatprep.subr.mxu0 0.0
    %1427 = vmatpush1.xpose.msra.mxu0 0.0
    %1428 = vmatprep.subr.mxu0 0.0
    %1429 = vmatpush1.xpose.msra.mxu0 0.0
    %1430 = vmatprep.subr.mxu0 0.0
    %1431 = vmatpush1.xpose.msra.mxu0 0.0
    %1432 = vmatprep.subr.mxu0 0.0
    %1433 = vmatpush1.xpose.msra.mxu0 0.0
    %1434 = vmatprep.subr.mxu0 0.0
    %1435 = vmatpush1.xpose.msra.mxu0 0.0
    %1436 = vmatprep.subr.mxu0 0.0
    %1437 = vmatpush1.xpose.msra.mxu0 0.0
    %1438 = vmatprep.subr.mxu0 0.0
    %1439 = vmatpush1.xpose.msra.mxu0 0.0
    %1440 = vmatprep.subr.mxu0 0.0
    %1441 = vmatpush1.xpose.msra.mxu0 0.0
    %1442 = vmatprep.subr.mxu0 0.0
    %1443 = vmatpush1.xpose.msra.mxu0 0.0
    %1444 = vmatprep.subr.mxu0 0.0
    %1445 = vmatpush1.xpose.msra.mxu0 0.0
    %1446 = vmatprep.subr.mxu0 0.0
    %1447 = vmatpush1.xpose.msra.mxu0 0.0
    %1448 = vmatprep.subr.mxu0 0.0
    %1449 = vmatpush1.xpose.msra.mxu0 0.0
    %1450 = vmatprep.subr.mxu0 0.0
    %1451 = vmatpush1.xpose.msra.mxu0 0.0
    %1452 = vmatprep.subr.mxu0 0.0
    %1453 = vmatpush1.xpose.msra.mxu0 0.0
    %1454 = vmatprep.subr.mxu0 0.0
    %1455 = vmatpush1.xpose.msra.mxu0 0.0
    %1456 = vmatprep.subr.mxu0 0.0
    %1457 = vmatpush1.xpose.msra.mxu0 0.0
    %1458 = vmatprep.subr.mxu0 0.0
    %1459 = vmatpush1.xpose.msra.mxu0 0.0
    %1460 = vmatprep.subr.mxu0 0.0
    %1461 = vmatpush1.xpose.msra.mxu0 0.0
    %1462 = vmatprep.subr.mxu0 0.0
    %1463 = vmatpush1.xpose.msra.mxu0 0.0
    %1464 = vmatprep.mubr.f32.mxu0 0.0
    %1465 = vmatmul.mubr.f32.gmra.mrb[0].mxu0 %v1396
    %v1466 = vpop.f32.mrb[0].mxu0
    %v1467 = vadd.f32 %v258, %v1466
    %v1468 = vpop.f32.mrb[0].mxu0
    %1469 = vdwg.mxu0
    %1470 = vrot.lane.b32.xlu0 %v179, 32
    %v1471 = vpop.permute.xlu0 %1470
    %1472 = vrot.lane.b32.xlu0 %v181, 32
    %v1473 = vpop.permute.xlu0 %1472
    %v1474 = vsel %vm99, %v1471, 0
    %v1476 = vsel %vm99, %v1473, 0
    %1478 = vmatprep.subr.mxu0 0.0
    %1479 = vmatpush1.xpose.msra.mxu0 %v1476
    %1480 = vmatprep.subr.mxu0 0.0
    %1481 = vmatpush1.xpose.msra.mxu0 0.0
    %1482 = vmatprep.subr.mxu0 0.0
    %1483 = vmatpush1.xpose.msra.mxu0 0.0
    %1484 = vmatprep.subr.mxu0 0.0
    %1485 = vmatpush1.xpose.msra.mxu0 0.0
    %1486 = vmatprep.subr.mxu0 0.0
    %1487 = vmatpush1.xpose.msra.mxu0 0.0
    %1488 = vmatprep.subr.mxu0 0.0
    %1489 = vmatpush1.xpose.msra.mxu0 0.0
    %1490 = vmatprep.subr.mxu0 0.0
    %1491 = vmatpush1.xpose.msra.mxu0 0.0
    %1492 = vmatprep.subr.mxu0 0.0
    %1493 = vmatpush1.xpose.msra.mxu0 0.0
    %1494 = vmatprep.subr.mxu0 0.0
    %1495 = vmatpush1.xpose.msra.mxu0 0.0
    %1496 = vmatprep.subr.mxu0 0.0
    %1497 = vmatpush1.xpose.msra.mxu0 0.0
    %1498 = vmatprep.subr.mxu0 0.0
    %1499 = vmatpush1.xpose.msra.mxu0 0.0
    %1500 = vmatprep.subr.mxu0 0.0
    %1501 = vmatpush1.xpose.msra.mxu0 0.0
    %1502 = vmatprep.subr.mxu0 0.0
    %1503 = vmatpush1.xpose.msra.mxu0 0.0
    %1504 = vmatprep.subr.mxu0 0.0
    %1505 = vmatpush1.xpose.msra.mxu0 0.0
    %1506 = vmatprep.subr.mxu0 0.0
    %1507 = vmatpush1.xpose.msra.mxu0 0.0
    %1508 = vmatprep.subr.mxu0 0.0
    %1509 = vmatpush1.xpose.msra.mxu0 0.0
    %1510 = vmatprep.subr.mxu0 0.0
    %1511 = vmatpush1.xpose.msra.mxu0 0.0
    %1512 = vmatprep.subr.mxu0 0.0
    %1513 = vmatpush1.xpose.msra.mxu0 0.0
    %1514 = vmatprep.subr.mxu0 0.0
    %1515 = vmatpush1.xpose.msra.mxu0 0.0
    %1516 = vmatprep.subr.mxu0 0.0
    %1517 = vmatpush1.xpose.msra.mxu0 0.0
    %1518 = vmatprep.subr.mxu0 0.0
    %1519 = vmatpush1.xpose.msra.mxu0 0.0
    %1520 = vmatprep.subr.mxu0 0.0
    %1521 = vmatpush1.xpose.msra.mxu0 0.0
    %1522 = vmatprep.subr.mxu0 0.0
    %1523 = vmatpush1.xpose.msra.mxu0 0.0
    %1524 = vmatprep.subr.mxu0 0.0
    %1525 = vmatpush1.xpose.msra.mxu0 0.0
    %1526 = vmatprep.subr.mxu0 0.0
    %1527 = vmatpush1.xpose.msra.mxu0 0.0
    %1528 = vmatprep.subr.mxu0 0.0
    %1529 = vmatpush1.xpose.msra.mxu0 0.0
    %1530 = vmatprep.subr.mxu0 0.0
    %1531 = vmatpush1.xpose.msra.mxu0 0.0
    %1532 = vmatprep.subr.mxu0 0.0
    %1533 = vmatpush1.xpose.msra.mxu0 0.0
    %1534 = vmatprep.subr.mxu0 0.0
    %1535 = vmatpush1.xpose.msra.mxu0 0.0
    %1536 = vmatprep.subr.mxu0 0.0
    %1537 = vmatpush1.xpose.msra.mxu0 0.0
    %1538 = vmatprep.subr.mxu0 0.0
    %1539 = vmatpush1.xpose.msra.mxu0 0.0
    %1540 = vmatprep.subr.mxu0 0.0
    %1541 = vmatpush1.xpose.msra.mxu0 0.0
    %1542 = vmatprep.mubr.f32.mxu0 0.0
    %1543 = vmatmul.mubr.f32.gmra.mrb[0].mxu0 %v1474
    %v1544 = vpop.f32.mrb[0].mxu0
    %v1545 = vadd.f32 %v259, %v1544
    %v1546 = vpop.f32.mrb[0].mxu0
    %1547 = vdwg.mxu0
    %v1548 = vsel %vm412, %v1467, -inf
    %1549 = vmax.xlane.f32.xlu0 %v1548
    %v1550 = vpop.xlane.xlu0 %1549
    %v1551 = vsel %vm412, %v1545, -inf
    %1552 = vmax.xlane.f32.xlu0 %v1551
    %v1553 = vpop.xlane.xlu0 %1552
    %v1554 = vsub.f32 %v1467, %v1550
    %v1555 = vsub.f32 %v1545, %v1553
    %v1556 = vmul.f32 %v1554, 1.442695
    %v1557 = vpow.pop %v1556
    %v1558 = vmul.f32 %v1555, 1.442695
    %v1559 = vpow.pop %v1558
    %v1560 = vsel %vm412, %v1557, 0.0
    %1561 = vadd.xlane.f32.xlu0 %v1560
    %v1562 = vpop.xlane.xlu0 %1561
    %v1563 = vsel %vm412, %v1559, 0.0
    %1564 = vadd.xlane.f32.xlu0 %v1563
    %v1565 = vpop.xlane.xlu0 %1564
    %v1566 = vrcp.pop %v1562
    %v1567 = vrcp.pop %v1565
    %v1568 = vmul.f32 %v1557, %v1566
    %v1569 = vmul.f32 %v1559, %v1567
    %1570 = vrot.lane.b32.xlu0 %v250, 32
    %v1571 = vpop.permute.xlu0 %1570
    %v1574 = vsel %vm412, %v1568, 0
    %1576 = vmatprep.subr.mxu0 0.0
    %1577 = vmatpush1.msra.mxu0 %v1571
    %1578 = vmatprep.subr.mxu0 0.0
    %1579 = vmatpush1.msra.mxu0 0.0
    %1580 = vmatprep.subr.mxu0 0.0
    %1581 = vmatpush1.msra.mxu0 0.0
    %1582 = vmatprep.subr.mxu0 0.0
    %1583 = vmatpush1.msra.mxu0 0.0
    %1584 = vmatprep.subr.mxu0 0.0
    %1585 = vmatpush1.msra.mxu0 0.0
    %1586 = vmatprep.subr.mxu0 0.0
    %1587 = vmatpush1.msra.mxu0 0.0
    %1588 = vmatprep.subr.mxu0 0.0
    %1589 = vmatpush1.msra.mxu0 0.0
    %1590 = vmatprep.subr.mxu0 0.0
    %1591 = vmatpush1.msra.mxu0 0.0
    %1592 = vmatprep.subr.mxu0 0.0
    %1593 = vmatpush1.msra.mxu0 0.0
    %1594 = vmatprep.subr.mxu0 0.0
    %1595 = vmatpush1.msra.mxu0 0.0
    %1596 = vmatprep.subr.mxu0 0.0
    %1597 = vmatpush1.msra.mxu0 0.0
    %1598 = vmatprep.subr.mxu0 0.0
    %1599 = vmatpush1.msra.mxu0 0.0
    %1600 = vmatprep.subr.mxu0 0.0
    %1601 = vmatpush1.msra.mxu0 0.0
    %1602 = vmatprep.subr.mxu0 0.0
    %1603 = vmatpush1.msra.mxu0 0.0
    %1604 = vmatprep.subr.mxu0 0.0
    %1605 = vmatpush1.msra.mxu0 0.0
    %1606 = vmatprep.subr.mxu0 0.0
    %1607 = vmatpush1.msra.mxu0 0.0
    %1608 = vmatprep.subr.mxu0 0.0
    %1609 = vmatpush1.msra.mxu0 0.0
    %1610 = vmatprep.subr.mxu0 0.0
    %1611 = vmatpush1.msra.mxu0 0.0
    %1612 = vmatprep.subr.mxu0 0.0
    %1613 = vmatpush1.msra.mxu0 0.0
    %1614 = vmatprep.subr.mxu0 0.0
    %1615 = vmatpush1.msra.mxu0 0.0
    %1616 = vmatprep.subr.mxu0 0.0
    %1617 = vmatpush1.msra.mxu0 0.0
    %1618 = vmatprep.subr.mxu0 0.0
    %1619 = vmatpush1.msra.mxu0 0.0
    %1620 = vmatprep.subr.mxu0 0.0
    %1621 = vmatpush1.msra.mxu0 0.0
    %1622 = vmatprep.subr.mxu0 0.0
    %1623 = vmatpush1.msra.mxu0 0.0
    %1624 = vmatprep.subr.mxu0 0.0
    %1625 = vmatpush1.msra.mxu0 0.0
    %1626 = vmatprep.subr.mxu0 0.0
    %1627 = vmatpush1.msra.mxu0 0.0
    %1628 = vmatprep.subr.mxu0 0.0
    %1629 = vmatpush1.msra.mxu0 0.0
    %1630 = vmatprep.subr.mxu0 0.0
    %1631 = vmatpush1.msra.mxu0 0.0
    %1632 = vmatprep.subr.mxu0 0.0
    %1633 = vmatpush1.msra.mxu0 0.0
    %1634 = vmatprep.subr.mxu0 0.0
    %1635 = vmatpush1.msra.mxu0 0.0
    %1636 = vmatprep.subr.mxu0 0.0
    %1637 = vmatpush1.msra.mxu0 0.0
    %1638 = vmatprep.subr.mxu0 0.0
    %1639 = vmatpush1.msra.mxu0 0.0
    %1640 = vmatprep.mubr.f32.mxu0 0.0
    %1641 = vmatmul.mubr.f32.gmra.mrb[0].mxu0 %v1574
    %v1642 = vpop.f32.mrb[0].mxu0
    %v1643 = vadd.f32 0.0, %v1642
    %v1644 = vpop.f32.mrb[0].mxu0
    %1645 = vdwg.mxu0
    %1646 = vrot.lane.b32.xlu0 %v255, 32
    %v1647 = vpop.permute.xlu0 %1646
    %v1650 = vsel %vm412, %v1569, 0
    %1652 = vmatprep.subr.mxu0 0.0
    %1653 = vmatpush1.msra.mxu0 %v1647
    %1654 = vmatprep.subr.mxu0 0.0
    %1655 = vmatpush1.msra.mxu0 0.0
    %1656 = vmatprep.subr.mxu0 0.0
    %1657 = vmatpush1.msra.mxu0 0.0
    %1658 = vmatprep.subr.mxu0 0.0
    %1659 = vmatpush1.msra.mxu0 0.0
    %1660 = vmatprep.subr.mxu0 0.0
    %1661 = vmatpush1.msra.mxu0 0.0
    %1662 = vmatprep.subr.mxu0 0.0
    %1663 = vmatpush1.msra.mxu0 0.0
    %1664 = vmatprep.subr.mxu0 0.0
    %1665 = vmatpush1.msra.mxu0 0.0
    %1666 = vmatprep.subr.mxu0 0.0
    %1667 = vmatpush1.msra.mxu0 0.0
    %1668 = vmatprep.subr.mxu0 0.0
    %1669 = vmatpush1.msra.mxu0 0.0
    %1670 = vmatprep.subr.mxu0 0.0
    %1671 = vmatpush1.msra.mxu0 0.0
    %1672 = vmatprep.subr.mxu0 0.0
    %1673 = vmatpush1.msra.mxu0 0.0
    %1674 = vmatprep.subr.mxu0 0.0
    %1675 = vmatpush1.msra.mxu0 0.0
    %1676 = vmatprep.subr.mxu0 0.0
    %1677 = vmatpush1.msra.mxu0 0.0
    %1678 = vmatprep.subr.mxu0 0.0
    %1679 = vmatpush1.msra.mxu0 0.0
    %1680 = vmatprep.subr.mxu0 0.0
    %1681 = vmatpush1.msra.mxu0 0.0
    %1682 = vmatprep.subr.mxu0 0.0
    %1683 = vmatpush1.msra.mxu0 0.0
    %1684 = vmatprep.subr.mxu0 0.0
    %1685 = vmatpush1.msra.mxu0 0.0
    %1686 = vmatprep.subr.mxu0 0.0
    %1687 = vmatpush1.msra.mxu0 0.0
    %1688 = vmatprep.subr.mxu0 0.0
    %1689 = vmatpush1.msra.mxu0 0.0
    %1690 = vmatprep.subr.mxu0 0.0
    %1691 = vmatpush1.msra.mxu0 0.0
    %1692 = vmatprep.subr.mxu0 0.0
    %1693 = vmatpush1.msra.mxu0 0.0
    %1694 = vmatprep.subr.mxu0 0.0
    %1695 = vmatpush1.msra.mxu0 0.0
    %1696 = vmatprep.subr.mxu0 0.0
    %1697 = vmatpush1.msra.mxu0 0.0
    %1698 = vmatprep.subr.mxu0 0.0
    %1699 = vmatpush1.msra.mxu0 0.0
    %1700 = vmatprep.subr.mxu0 0.0
    %1701 = vmatpush1.msra.mxu0 0.0
    %1702 = vmatprep.subr.mxu0 0.0
    %1703 = vmatpush1.msra.mxu0 0.0
    %1704 = vmatprep.subr.mxu0 0.0
    %1705 = vmatpush1.msra.mxu0 0.0
    %1706 = vmatprep.subr.mxu0 0.0
    %1707 = vmatpush1.msra.mxu0 0.0
    %1708 = vmatprep.subr.mxu0 0.0
    %1709 = vmatpush1.msra.mxu0 0.0
    %1710 = vmatprep.subr.mxu0 0.0
    %1711 = vmatpush1.msra.mxu0 0.0
    %1712 = vmatprep.subr.mxu0 0.0
    %1713 = vmatpush1.msra.mxu0 0.0
    %1714 = vmatprep.subr.mxu0 0.0
    %1715 = vmatpush1.msra.mxu0 0.0
    %1716 = vmatprep.mubr.f32.mxu0 0.0
    %1717 = vmatmul.mubr.f32.gmra.mrb[0].mxu0 %v1650
    %v1718 = vpop.f32.mrb[0].mxu0
    %v1719 = vadd.f32 0.0, %v1718
    %v1720 = vpop.f32.mrb[0].mxu0
    %1721 = vdwg.mxu0
    %v1722 = vsel %vm99, %v1643, 0.0
    %1723 = vadd.xlane.f32.xlu0 %v1722
    %v1724 = vpop.xlane.xlu0 %1723
    %v1725 = vsel %vm99, %v1719, 0.0
    %1726 = vadd.xlane.f32.xlu0 %v1725
    %v1727 = vpop.xlane.xlu0 %1726
    %v1728 = vmul.f32 %v1724, %v587
    %v1729 = vmul.f32 %v1727, %v587
    %v1730 = vsub.f32 %v1643, %v1728
    %v1731 = vsub.f32 %v1719, %v1729
    %v1732 = vmul.f32 %v1730, %v1730
    %v1733 = vmul.f32 %v1731, %v1731
    %v1734 = vsel %vm99, %v1732, 0.0
    %1735 = vadd.xlane.f32.xlu0 %v1734
    %v1736 = vpop.xlane.xlu0 %1735
    %v1737 = vsel %vm99, %v1733, 0.0
    %1738 = vadd.xlane.f32.xlu0 %v1737
    %v1739 = vpop.xlane.xlu0 %1738
    %v1740 = vmul.f32 %v1736, %v587
    %v1741 = vmul.f32 %v1739, %v587
    %v1742 = vadd.f32 %v1740, 1e-05
    %v1743 = vadd.f32 %v1741, 1e-05
    %v1744 = vrsqrt.pop %v1742
    %v1745 = vrsqrt.pop %v1743
    %v1746 = vmul.f32 %v1730, %v1744
    %v1747 = vmul.f32 %v1731, %v1745
    %s1748 = scalar_lea.vmem %s4, 3
    %v1749 = vld [vmem:[%s1748] sm:$0x1]
    %v1751 = vlaneseq
    %v1752 = vshrl.u32 %v1751, 7
    %v1753 = vsub.s32 0, %v1752
    %v1754 = vrot.slane %v1749, %v1753
    %v1756 = vmul.f32 %v1746, %v1754
    %v1757 = vmul.f32 %v1747, %v1754
    %s1758 = scalar_lea.vmem %s5, 3
    %v1759 = vld [vmem:[%s1758] sm:$0x1]
    %v1761 = vlaneseq
    %v1762 = vshrl.u32 %v1761, 7
    %v1763 = vsub.s32 0, %v1762
    %v1764 = vrot.slane %v1759, %v1763
    %v1766 = vadd.f32 %v1756, %v1764
    %v1767 = vadd.f32 %v1757, %v1764
    %v1768 = vmax.f32 %v1766, 0.0
    %v1769 = vmax.f32 %v1767, 0.0
    %v1770 = vadd.f32 %v1390, %v1768
    %v1771 = vadd.f32 %v1391, %v1769
    %1772 = vst.msk [vmem:[#allocation9] sm:$0xff] %vm412, %v1568
    %1773 = vst.msk [vmem:[#allocation9 + $0x8] sm:$0xff] %vm412, %v1569
    %1774 = vst.msk [vmem:[#allocation8] sm:$0xff] %vm99, %v1770
    %1775 = vst.msk [vmem:[#allocation8 + $0x8] sm:$0xff] %vm99, %v1771
    // Predicated region
    $region38: #{tpu_custom_call.1} parent=1 // pred_check
      _
    $region39: #{tpu_custom_call.1} parent=1 // pred_check_branch
      %1777 = sbr.rel (0) target = $region41
    $region40: #{tpu_custom_call.1} parent=1 // pred_region
      %s1779 = ssub.s32 256, 256
      %1780 = vsyncadd [#allocation4], %s1779
      %s1781 = sshll.u32 [#allocation8], 4
      %s1782 = int_to_ptr.vmem [resolvable:$true] %s1781
      %1787 = dma.vmem_to_hbm [thread:$0]  %s1782, 256, %s6, [#allocation4], 128, 128, 8
    $region41: #{tpu_custom_call.1} parent=1 // pred_fallthru
      _
    // Predicated region
    $region42: #{tpu_custom_call.1} parent=1 // pred_check
      _
    $region43: #{tpu_custom_call.1} parent=1 // pred_check_branch
      %1789 = sbr.rel (0) target = $region45
    $region44: #{tpu_custom_call.1} parent=1 // pred_region
      %s1791 = ssub.s32 256, 256
      %1792 = vsyncadd [#allocation10], %s1791
      %s1793 = sshll.u32 [#allocation9], 4
      %s1794 = int_to_ptr.vmem [resolvable:$true] %s1793
      %1799 = dma.vmem_to_hbm [thread:$0]  %s1794, 256, %s7, [#allocation10], 128, 128, 8
    $region45: #{tpu_custom_call.1} parent=1 // pred_fallthru
      _
    // Predicated region
    $region46: #{tpu_custom_call.1} parent=1 // pred_check
      _
    $region47: #{tpu_custom_call.1} parent=1 // pred_check_branch
      %1801 = sbr.rel (0) target = $region49
    $region48: #{tpu_custom_call.1} parent=1 // pred_region
      %1802 = dma.done [#allocation4], 256
    $region49: #{tpu_custom_call.1} parent=1 // pred_fallthru
      _
    // Predicated region
    $region50: #{tpu_custom_call.1} parent=1 // pred_check
      _
    $region51: #{tpu_custom_call.1} parent=1 // pred_check_branch
      %1804 = sbr.rel (0) target = $region53
    $region52: #{tpu_custom_call.1} parent=1 // pred_region
      %1805 = dma.done [#allocation10], 256
    $region53: #{tpu_custom_call.1} parent=1 // pred_fallthru
      _
    %1806 = vsyncpa [#allocation3], 1
    %1807 = vsyncpa [#allocation6], 1
    %1808 = vsyncpa [#allocation4], 1
    %1809 = vsyncpa [#allocation10], 1

</llo_original>
